<compile_context>
chip_gen: v5e
topology: v5e:2x2
jax: 0.10.0
libtpu: 0.0.40
codegen_flags: <defaults>
</compile_context>

<pallas_src>
import functools

import jax
import jax.numpy as jnp
from jax.experimental import pallas as pl
from jax.experimental.pallas import tpu as pltpu

MSG_EPS = 1e-7   # GENConv message eps
LN_EPS = 1e-5    # torch.nn.LayerNorm default eps


def _round_up(v, m):
    return (v + m - 1) // m * m


def _ln_affine(v, g, b):
    mu = jnp.mean(v, axis=-1, keepdims=True)
    var = jnp.mean((v - mu) * (v - mu), axis=-1, keepdims=True)
    return (v - mu) * jax.lax.rsqrt(var + LN_EPS) * g + b


# ---------------------------------------------------------------------------
# Fused DeepGCN layer kernel.
#   prenorm=True, outer_residual=True  :  x_new = x + GENConv(relu(LN(x)))   (res+ layer)
#   prenorm=False, outer_residual=False:  x_new = GENConv(x)                 (first layer)
# GENConv:  m_j = relu(h_j) + eps ;  alpha = softmax_j(t*m_j)  per dst, per channel
#           agg_i = sum_j A[i,j] * alpha_ij * m_j ;  out = MLP(agg + h_dst)
# ---------------------------------------------------------------------------
def _gen_layer_kernel(t_ref, x_src_ref, x_dst_ref, a_ref, png_ref, pnb_ref,
                      w1_ref, b1_ref, g2_ref, be2_ref, w2_ref, b2_ref,
                      o_ref, acc_ref, mmax_ref, *, prenorm, outer_residual):
    k = pl.program_id(1)

    @pl.when(k == 0)
    def _init():
        acc_ref[...] = jnp.zeros_like(acc_ref)
        mmax_ref[...] = jnp.full_like(mmax_ref, -jnp.inf)

    t = t_ref[0, 0]

    # ---- source side: res+ prologue, GENConv message, partial aggregation ----
    xs = x_src_ref[...]                                            # (TS, H) f32
    if prenorm:
        xs = jnp.maximum(_ln_affine(xs, png_ref[...], pnb_ref[...]), 0.0)
    m = jnp.maximum(xs, 0.0) + MSG_EPS                             # (TS, H)
    tm = t * m
    m_old = mmax_ref[...]                                          # (1, H)
    m_new = jnp.maximum(m_old, jnp.max(tm, axis=0, keepdims=True))
    scale = jnp.exp(m_old - m_new)                                 # 0.0 on first src tile
    e = jnp.exp(tm - m_new)                                        # (TS, H), <= 1
    msg = jnp.concatenate([e * m, e], axis=-1).astype(jnp.bfloat16)  # (TS, 2H)
    # one fused MXU matmul produces [num | den] partials for this src tile
    part = jnp.dot(a_ref[...], msg, preferred_element_type=jnp.float32)  # (TD, 2H)
    acc_ref[...] = acc_ref[...] * jnp.concatenate([scale, scale], axis=-1) + part
    mmax_ref[...] = m_new

    # ---- epilogue: normalize, GENConv residual, MLP, outer residual, store ----
    @pl.when(k == pl.num_programs(1) - 1)
    def _finalize():
        xd = x_dst_ref[...]                                        # (TD, H)
        h = xd
        if prenorm:
            h = jnp.maximum(_ln_affine(h, png_ref[...], pnb_ref[...]), 0.0)
        hdim = h.shape[-1]
        acc = acc_ref[...]
        num = acc[:, :hdim]
        den = acc[:, hdim:]
        inv = jnp.where(den > 0.0, pl.reciprocal(den, approx=True), 0.0)
        out = num * inv + h                                        # agg + x_dst
        # MLP: Linear(H,2H) -> LayerNorm(2H) -> ReLU -> Linear(2H,H)
        z = jnp.dot(out, w1_ref[...], preferred_element_type=jnp.float32) + b1_ref[...]
        z = jnp.maximum(_ln_affine(z, g2_ref[...], be2_ref[...]), 0.0)
        y = jnp.dot(z, w2_ref[...], preferred_element_type=jnp.float32) + b2_ref[...]
        if outer_residual:
            y = y + xd
        o_ref[...] = y.astype(o_ref.dtype)


def gen_layer(x, a_bf16, conv_params, prenorm_g=None, prenorm_b=None,
              *, prenorm, outer_residual, tile):
    n, hdim = x.shape
    t, w1, b1, g2, be2, w2, b2 = conv_params
    h2 = w1.shape[1]
    if prenorm_g is None:
        prenorm_g = jnp.ones((1, hdim), jnp.float32)
        prenorm_b = jnp.zeros((1, hdim), jnp.float32)

    def const(shape):
        nd = len(shape)
        return pl.BlockSpec(shape, lambda i, k, _nd=nd: (0,) * _nd)

    kernel = functools.partial(_gen_layer_kernel, prenorm=prenorm,
                               outer_residual=outer_residual)

    return pl.pallas_call(
        kernel,
        out_shape=jax.ShapeDtypeStruct((n, hdim), jnp.float32),
        grid=(n // tile, n // tile),
        in_specs=[
            pl.BlockSpec(memory_space=pltpu.MemorySpace.SMEM),       # t (scalar)
            pl.BlockSpec((tile, hdim), lambda i, k: (k, 0)),         # x (source tile)
            pl.BlockSpec((tile, hdim), lambda i, k: (i, 0)),         # x (destination tile)
            pl.BlockSpec((tile, tile), lambda i, k: (i, k)),         # A[dst, src] tile (bf16)
            const((1, hdim)),                                        # pre-norm gamma
            const((1, hdim)),                                        # pre-norm beta
            const((hdim, h2)),                                       # MLP W1
            const((1, h2)),                                          # MLP b1
            const((1, h2)),                                          # MLP LN gamma
            const((1, h2)),                                          # MLP LN beta
            const((h2, hdim)),                                       # MLP W2
            const((1, hdim)),                                        # MLP b2
        ],
        out_specs=pl.BlockSpec((tile, hdim), lambda i, k: (i, 0)),
        scratch_shapes=[
            pltpu.VMEM((tile, 2 * hdim), jnp.float32),               # [num | den] accumulator
            pltpu.VMEM((1, hdim), jnp.float32),                      # running per-channel max
        ],
        compiler_params=pltpu.CompilerParams(
            dimension_semantics=("parallel", "arbitrary"),
            vmem_limit_bytes=32 * 1024 * 1024,
        ),
    )(t, x, x, a_bf16, prenorm_g, prenorm_b, w1, b1, g2, be2, w2, b2)


# ---------------------------------------------------------------------------
# Final LayerNorm + ReLU (called once at the end of DeeperGCN.forward)
# ---------------------------------------------------------------------------
def _ln_relu_kernel(x_ref, g_ref, b_ref, o_ref):
    o_ref[...] = jnp.maximum(_ln_affine(x_ref[...], g_ref[...], b_ref[...]), 0.0)


def ln_relu(x, g, b, *, tile):
    n, hdim = x.shape
    return pl.pallas_call(
        _ln_relu_kernel,
        out_shape=jax.ShapeDtypeStruct((n, hdim), jnp.float32),
        grid=(n // tile,),
        in_specs=[pl.BlockSpec((tile, hdim), lambda i: (i, 0)),
                  pl.BlockSpec((1, hdim), lambda i: (0, 0)),
                  pl.BlockSpec((1, hdim), lambda i: (0, 0))],
        out_specs=pl.BlockSpec((tile, hdim), lambda i: (i, 0)),
        compiler_params=pltpu.CompilerParams(dimension_semantics=("parallel",)),
    )(x, g, b)


# ---------------------------------------------------------------------------
# DeeperGCN forward (inference):
#   x = conv_0(x)
#   for i in 1..L-1:  x = x + conv_i( dropout( relu( LN_i(x) ) ) )
#   x = relu( LN_0(x) );  x = dropout(x)
# ---------------------------------------------------------------------------
def deeper_gcn_forward(x, a, params, *, max_tile=256):
    n, _ = x.shape
    tile = min(max_tile, _round_up(n, 8))
    n_pad = _round_up(n, tile)
    if n_pad != n:
        x = jnp.pad(x, ((0, n_pad - n), (0, 0)))
        a = jnp.pad(a, ((0, n_pad - n), (0, n_pad - n)))
    a = a.astype(jnp.bfloat16)   # stream adjacency at half the bytes (0/1 counts exact)

    x = gen_layer(x, a, params[0]["conv"], prenorm=False, outer_residual=False, tile=tile)
    for i in range(1, len(params)):
        # dropout(p=0.1) inside the res+ block is identity in eval mode
        x = gen_layer(x, a, params[i]["conv"],
                      params[i]["norm_g"], params[i]["norm_b"],
                      prenorm=True, outer_residual=True, tile=tile)
    x = ln_relu(x, params[0]["norm_g"], params[0]["norm_b"], tile=tile)
    # TODO(synk): final F.dropout(p=0.1) is eval-mode identity; training-mode dropout not implemented.
    return x[:n]


def init_params(key, hidden, num_layers):
    params = []
    for _ in range(num_layers):
        key, k1, k2 = jax.random.split(key, 3)
        params.append({
            "norm_g": jnp.ones((1, hidden), jnp.float32),
            "norm_b": jnp.zeros((1, hidden), jnp.float32),
            "conv": (
                jnp.ones((1, 1), jnp.float32),                                    # t (learn_t init 1.0)
                jax.random.normal(k1, (hidden, 2 * hidden), jnp.float32) * 0.1,   # MLP W1
                jnp.zeros((1, 2 * hidden), jnp.float32),                          # MLP b1
                jnp.ones((1, 2 * hidden), jnp.float32),                           # MLP LN gamma
                jnp.zeros((1, 2 * hidden), jnp.float32),                          # MLP LN beta
                jax.random.normal(k2, (2 * hidden, hidden), jnp.float32) * 0.1,   # MLP W2
                jnp.zeros((1, hidden), jnp.float32),                              # MLP b2
            ),
        })
    return params


# Pure-JAX reference (f32, dense) for a loose numerical sanity check.
def _reference_forward(x, a, params):
    def conv(h, p):
        t, w1, b1, g2, be2, w2, b2 = p
        m = jnp.maximum(h, 0.0) + MSG_EPS
        tm = t[0, 0] * m
        e = jnp.exp(tm - jnp.max(tm, axis=0, keepdims=True))
        num = a @ (e * m)
        den = a @ e
        agg = jnp.where(den > 0.0, num / jnp.where(den > 0.0, den, 1.0), 0.0)
        z = agg + h
        z = jnp.maximum(_ln_affine(z @ w1 + b1, g2, be2), 0.0)
        return z @ w2 + b2

    x = conv(x, params[0]["conv"])
    for i in range(1, len(params)):
        h = jnp.maximum(_ln_affine(x, params[i]["norm_g"], params[i]["norm_b"]), 0.0)
        x = x + conv(h, params[i]["conv"])
    return jnp.maximum(_ln_affine(x, params[0]["norm_g"], params[0]["norm_b"]), 0.0)


if __name__ == "__main__":
    N, HIDDEN, NUM_LAYERS, E = 32, 32, 3, 64

    key = jax.random.PRNGKey(0)
    kx, ke, kp = jax.random.split(key, 3)

    x = jax.random.normal(kx, (N, HIDDEN), jnp.float32)
    edge_index = jax.random.randint(ke, (2, E), 0, N, dtype=jnp.int32)

    # dense adjacency A[dst, src] (source_to_target message flow); multi-edges -> counts
    adj = jnp.zeros((N, N), jnp.float32).at[edge_index[1], edge_index[0]].add(1.0)

    params = init_params(kp, HIDDEN, NUM_LAYERS)

    fwd = jax.jit(deeper_gcn_forward)
    out = jax.block_until_ready(fwd(x, adj, params))

    assert out.shape == (N, HIDDEN)
    assert bool(jnp.all(jnp.isfinite(out)))

    ref = _reference_forward(x, adj, params)
    assert bool(jnp.allclose(out, ref, atol=1e-1, rtol=1e-1)), \
        float(jnp.max(jnp.abs(out - ref)))

    print("KERNEL_OK")
</pallas_src>

<mosaic_0001>
module attributes {stable_mosaic.version = 11 : i64} {
  func.func @_gen_layer_kernel(%arg0: i32, %arg1: i32, %arg2: memref<1x1xf32, #tpu.memory_space<smem>>, %arg3: memref<32x32xf32, #tpu.memory_space<vmem>>, %arg4: memref<32x32xf32, #tpu.memory_space<vmem>>, %arg5: memref<32x32xbf16, #tpu.memory_space<vmem>>, %arg6: memref<1x32xf32, #tpu.memory_space<vmem>>, %arg7: memref<1x32xf32, #tpu.memory_space<vmem>>, %arg8: memref<32x64xf32, #tpu.memory_space<vmem>>, %arg9: memref<1x64xf32, #tpu.memory_space<vmem>>, %arg10: memref<1x64xf32, #tpu.memory_space<vmem>>, %arg11: memref<1x64xf32, #tpu.memory_space<vmem>>, %arg12: memref<64x32xf32, #tpu.memory_space<vmem>>, %arg13: memref<1x32xf32, #tpu.memory_space<vmem>>, %arg14: memref<32x32xf32, #tpu.memory_space<vmem>>, %arg15: memref<32x64xf32, #tpu.memory_space<vmem>>, %arg16: memref<1x32xf32, #tpu.memory_space<vmem>>) attributes {dimension_semantics = [#tpu.dimension_semantics<parallel>, #tpu.dimension_semantics<arbitrary>], iteration_bounds = array<i64: 1, 1>, scalar_prefetch = 0 : i64, scratch_operands = 2 : i64, tpu.core_type = #tpu.core_type<tc>, window_params = [{transform_indices = @transform_0, window_bounds = array<i64: 1, 1>}, {transform_indices = @transform_1, window_bounds = array<i64: 32, 32>}, {transform_indices = @transform_2, window_bounds = array<i64: 32, 32>}, {transform_indices = @transform_3, window_bounds = array<i64: 32, 32>}, {pipeline_mode = #tpu.pipeline_mode<synchronous>, transform_indices = @transform_4, window_bounds = array<i64: 1, 32>}, {pipeline_mode = #tpu.pipeline_mode<synchronous>, transform_indices = @transform_5, window_bounds = array<i64: 1, 32>}, {pipeline_mode = #tpu.pipeline_mode<synchronous>, transform_indices = @transform_6, window_bounds = array<i64: 32, 64>}, {pipeline_mode = #tpu.pipeline_mode<synchronous>, transform_indices = @transform_7, window_bounds = array<i64: 1, 64>}, {pipeline_mode = #tpu.pipeline_mode<synchronous>, transform_indices = @transform_8, window_bounds = array<i64: 1, 64>}, {pipeline_mode = #tpu.pipeline_mode<synchronous>, transform_indices = @transform_9, window_bounds = array<i64: 1, 64>}, {pipeline_mode = #tpu.pipeline_mode<synchronous>, transform_indices = @transform_10, window_bounds = array<i64: 64, 32>}, {pipeline_mode = #tpu.pipeline_mode<synchronous>, transform_indices = @transform_11, window_bounds = array<i64: 1, 32>}, {transform_indices = @transform_12, window_bounds = array<i64: 32, 32>}]} {
    %c0_i32 = arith.constant 0 : i32
    %0 = arith.cmpi eq, %arg1, %c0_i32 : i32
    %1 = arith.extui %0 : i1 to i32
    %c0_i32_0 = arith.constant 0 : i32
    %2 = arith.cmpi ne, %1, %c0_i32_0 : i32
    scf.if %2 {
      %cst_19 = arith.constant 0.000000e+00 : f32
      %35 = vector.broadcast %cst_19 : f32 to vector<32x64xf32>
      %c0_20 = arith.constant 0 : index
      %c0_21 = arith.constant 0 : index
      %36 = vector.load %arg15[%c0_20, %c0_21] : memref<32x64xf32, #tpu.memory_space<vmem>>, vector<32x64xf32>
      tpu.vector_store %arg15[%c0_20, %c0_21], %35 {strides = array<i32>} : memref<32x64xf32, #tpu.memory_space<vmem>>, vector<32x64xf32>,
      %cst_22 = arith.constant 0xFF800000 : f32
      %37 = vector.broadcast %cst_22 : f32 to vector<1x32xf32>
      %c0_23 = arith.constant 0 : index
      %c0_24 = arith.constant 0 : index
      %38 = vector.load %arg16[%c0_23, %c0_24] : memref<1x32xf32, #tpu.memory_space<vmem>>, vector<1x32xf32>
      tpu.vector_store %arg16[%c0_23, %c0_24], %37 {strides = array<i32>} : memref<1x32xf32, #tpu.memory_space<vmem>>, vector<1x32xf32>,
    } else {
    }
    %c0 = arith.constant 0 : index
    %c0_1 = arith.constant 0 : index
    %3 = memref.load %arg2[%c0, %c0_1] : memref<1x1xf32, #tpu.memory_space<smem>>
    %c0_2 = arith.constant 0 : index
    %c0_3 = arith.constant 0 : index
    %4 = vector.load %arg3[%c0_2, %c0_3] : memref<32x32xf32, #tpu.memory_space<vmem>>, vector<32x32xf32>
    %cst = arith.constant 0.000000e+00 : f32
    %5 = vector.broadcast %cst : f32 to vector<32x32xf32>
    %6 = arith.maximumf %4, %5 : vector<32x32xf32>
    %cst_4 = arith.constant 1.000000e-07 : f32
    %7 = vector.broadcast %cst_4 : f32 to vector<32x32xf32>
    %8 = arith.addf %6, %7 : vector<32x32xf32>
    %9 = vector.broadcast %3 : f32 to vector<32x32xf32>
    %10 = arith.mulf %9, %8 : vector<32x32xf32>
    %c0_5 = arith.constant 0 : index
    %c0_6 = arith.constant 0 : index
    %11 = vector.load %arg16[%c0_5, %c0_6] : memref<1x32xf32, #tpu.memory_space<vmem>>, vector<1x32xf32>
    %cst_7 = arith.constant dense<0xFF800000> : vector<32xf32>
    %12 = vector.multi_reduction <maximumf>, %10, %cst_7 [0] : vector<32x32xf32> to vector<32xf32>
    %13 = vector.shape_cast %12 : vector<32xf32> to vector<1x32xf32>
    %14 = arith.maximumf %11, %13 : vector<1x32xf32>
    %15 = arith.subf %11, %14 : vector<1x32xf32>
    %16 = math.exp %15 : vector<1x32xf32>
    %17 = vector.broadcast %14 : vector<1x32xf32> to vector<32x32xf32>
    %18 = arith.subf %10, %17 : vector<32x32xf32>
    %19 = math.exp %18 : vector<32x32xf32>
    %20 = arith.mulf %19, %8 : vector<32x32xf32>
    %21 = tpu.concatenate %20, %19 in 1 : vector<32x32xf32>, vector<32x32xf32> -> vector<32x64xf32>
    %22 = arith.truncf %21 : vector<32x64xf32> to vector<32x64xbf16>
    %c0_8 = arith.constant 0 : index
    %c0_9 = arith.constant 0 : index
    %23 = vector.load %arg5[%c0_8, %c0_9] : memref<32x32xbf16, #tpu.memory_space<vmem>>, vector<32x32xbf16>
    %cst_10 = arith.constant dense<0.000000e+00> : vector<32x64xf32>
    %24 = tpu.matmul %23, %22, %cst_10 {dimension_numbers = #tpu.dot_dimension_numbers<[1], [0], [0], [1], [0, 0, 1, 1], [], []>} : vector<32x32xbf16>, vector<32x64xbf16>, vector<32x64xf32> -> vector<32x64xf32>
    %c0_11 = arith.constant 0 : index
    %c0_12 = arith.constant 0 : index
    %25 = vector.load %arg15[%c0_11, %c0_12] : memref<32x64xf32, #tpu.memory_space<vmem>>, vector<32x64xf32>
    %26 = tpu.concatenate %16, %16 in 1 : vector<1x32xf32>, vector<1x32xf32> -> vector<1x64xf32>
    %27 = vector.broadcast %26 : vector<1x64xf32> to vector<32x64xf32>
    %28 = arith.mulf %25, %27 : vector<32x64xf32>
    %29 = arith.addf %28, %24 : vector<32x64xf32>
    %c0_13 = arith.constant 0 : index
    %c0_14 = arith.constant 0 : index
    %30 = vector.load %arg15[%c0_13, %c0_14] : memref<32x64xf32, #tpu.memory_space<vmem>>, vector<32x64xf32>
    tpu.vector_store %arg15[%c0_13, %c0_14], %29 {strides = array<i32>} : memref<32x64xf32, #tpu.memory_space<vmem>>, vector<32x64xf32>,
    %c0_15 = arith.constant 0 : index
    %c0_16 = arith.constant 0 : index
    %31 = vector.load %arg16[%c0_15, %c0_16] : memref<1x32xf32, #tpu.memory_space<vmem>>, vector<1x32xf32>
    tpu.vector_store %arg16[%c0_15, %c0_16], %14 {strides = array<i32>} : memref<1x32xf32, #tpu.memory_space<vmem>>, vector<1x32xf32>,
    %c0_i32_17 = arith.constant 0 : i32
    %32 = arith.cmpi eq, %arg1, %c0_i32_17 : i32
    %33 = arith.extui %32 : i1 to i32
    %c0_i32_18 = arith.constant 0 : i32
    %34 = arith.cmpi ne, %33, %c0_i32_18 : i32
    scf.if %34 {
      %c0_19 = arith.constant 0 : index
      %c0_20 = arith.constant 0 : index
      %35 = vector.load %arg4[%c0_19, %c0_20] : memref<32x32xf32, #tpu.memory_space<vmem>>, vector<32x32xf32>
      %c0_21 = arith.constant 0 : index
      %c0_22 = arith.constant 0 : index
      %36 = vector.load %arg15[%c0_21, %c0_22] : memref<32x64xf32, #tpu.memory_space<vmem>>, vector<32x64xf32>
      %37 = vector.extract_strided_slice %36 {offsets = [0, 0], sizes = [32, 32], strides = [1, 1]} : vector<32x64xf32> to vector<32x32xf32>
      %38 = vector.extract_strided_slice %36 {offsets = [0, 32], sizes = [32, 32], strides = [1, 1]} : vector<32x64xf32> to vector<32x32xf32>
      %cst_23 = arith.constant 0.000000e+00 : f32
      %39 = vector.broadcast %cst_23 : f32 to vector<32x32xf32>
      %40 = arith.cmpf ogt, %38, %39 : vector<32x32xf32>
      %41 = tpu.reciprocal %38 {approx = true} : vector<32x32xf32> -> vector<32x32xf32>
      %cst_24 = arith.constant 0.000000e+00 : f32
      %42 = vector.broadcast %cst_24 : f32 to vector<32x32xf32>
      %43 = arith.select %40, %41, %42 : vector<32x32xi1>, vector<32x32xf32>
      %44 = arith.mulf %37, %43 : vector<32x32xf32>
      %45 = arith.addf %44, %35 : vector<32x32xf32>
      %c0_25 = arith.constant 0 : index
      %c0_26 = arith.constant 0 : index
      %46 = vector.load %arg8[%c0_25, %c0_26] : memref<32x64xf32, #tpu.memory_space<vmem>>, vector<32x64xf32>
      %cst_27 = arith.constant dense<0.000000e+00> : vector<32x64xf32>
      %47 = tpu.matmul %45, %46, %cst_27 {dimension_numbers = #tpu.dot_dimension_numbers<[1], [0], [0], [1], [0, 0, 1, 1], [], []>} : vector<32x32xf32>, vector<32x64xf32>, vector<32x64xf32> -> vector<32x64xf32>
      %c0_28 = arith.constant 0 : index
      %c0_29 = arith.constant 0 : index
      %48 = vector.load %arg9[%c0_28, %c0_29] : memref<1x64xf32, #tpu.memory_space<vmem>>, vector<1x64xf32>
      %49 = vector.broadcast %48 : vector<1x64xf32> to vector<32x64xf32>
      %50 = arith.addf %47, %49 : vector<32x64xf32>
      %c0_30 = arith.constant 0 : index
      %c0_31 = arith.constant 0 : index
      %51 = vector.load %arg10[%c0_30, %c0_31] : memref<1x64xf32, #tpu.memory_space<vmem>>, vector<1x64xf32>
      %c0_32 = arith.constant 0 : index
      %c0_33 = arith.constant 0 : index
      %52 = vector.load %arg11[%c0_32, %c0_33] : memref<1x64xf32, #tpu.memory_space<vmem>>, vector<1x64xf32>
      %cst_34 = arith.constant dense<0.000000e+00> : vector<32xf32>
      %53 = vector.multi_reduction <add>, %50, %cst_34 [1] : vector<32x64xf32> to vector<32xf32>
      %54 = vector.shape_cast %53 : vector<32xf32> to vector<32x1xf32>
      %cst_35 = arith.constant 6.400000e+01 : f32
      %55 = vector.broadcast %cst_35 : f32 to vector<32x1xf32>
      %56 = arith.divf %54, %55 : vector<32x1xf32>
      %57 = vector.broadcast %56 : vector<32x1xf32> to vector<32x64xf32>
      %58 = arith.subf %50, %57 : vector<32x64xf32>
      %59 = vector.broadcast %56 : vector<32x1xf32> to vector<32x64xf32>
      %60 = arith.subf %50, %59 : vector<32x64xf32>
      %61 = arith.mulf %58, %60 : vector<32x64xf32>
      %cst_36 = arith.constant dense<0.000000e+00> : vector<32xf32>
      %62 = vector.multi_reduction <add>, %61, %cst_36 [1] : vector<32x64xf32> to vector<32xf32>
      %63 = vector.shape_cast %62 : vector<32xf32> to vector<32x1xf32>
      %cst_37 = arith.constant 6.400000e+01 : f32
      %64 = vector.broadcast %cst_37 : f32 to vector<32x1xf32>
      %65 = arith.divf %63, %64 : vector<32x1xf32>
      %66 = vector.broadcast %56 : vector<32x1xf32> to vector<32x64xf32>
      %67 = arith.subf %50, %66 : vector<32x64xf32>
      %cst_38 = arith.constant 9.99999974E-6 : f32
      %68 = vector.broadcast %cst_38 : f32 to vector<32x1xf32>
      %69 = arith.addf %65, %68 : vector<32x1xf32>
      %70 = math.rsqrt %69 : vector<32x1xf32>
      %71 = vector.broadcast %70 : vector<32x1xf32> to vector<32x64xf32>
      %72 = arith.mulf %67, %71 : vector<32x64xf32>
      %73 = vector.broadcast %51 : vector<1x64xf32> to vector<32x64xf32>
      %74 = arith.mulf %72, %73 : vector<32x64xf32>
      %75 = vector.broadcast %52 : vector<1x64xf32> to vector<32x64xf32>
      %76 = arith.addf %74, %75 : vector<32x64xf32>
      %cst_39 = arith.constant 0.000000e+00 : f32
      %77 = vector.broadcast %cst_39 : f32 to vector<32x64xf32>
      %78 = arith.maximumf %76, %77 : vector<32x64xf32>
      %c0_40 = arith.constant 0 : index
      %c0_41 = arith.constant 0 : index
      %79 = vector.load %arg12[%c0_40, %c0_41] : memref<64x32xf32, #tpu.memory_space<vmem>>, vector<64x32xf32>
      %cst_42 = arith.constant dense<0.000000e+00> : vector<32x32xf32>
      %80 = tpu.matmul %78, %79, %cst_42 {dimension_numbers = #tpu.dot_dimension_numbers<[1], [0], [0], [1], [0, 0, 1, 1], [], []>} : vector<32x64xf32>, vector<64x32xf32>, vector<32x32xf32> -> vector<32x32xf32>
      %c0_43 = arith.constant 0 : index
      %c0_44 = arith.constant 0 : index
      %81 = vector.load %arg13[%c0_43, %c0_44] : memref<1x32xf32, #tpu.memory_space<vmem>>, vector<1x32xf32>
      %82 = vector.broadcast %81 : vector<1x32xf32> to vector<32x32xf32>
      %83 = arith.addf %80, %82 : vector<32x32xf32>
      %c0_45 = arith.constant 0 : index
      %c0_46 = arith.constant 0 : index
      %84 = vector.load %arg14[%c0_45, %c0_46] : memref<32x32xf32, #tpu.memory_space<vmem>>, vector<32x32xf32>
      tpu.vector_store %arg14[%c0_45, %c0_46], %83 {strides = array<i32>} : memref<32x32xf32, #tpu.memory_space<vmem>>, vector<32x32xf32>,
    } else {
    }
    return
  }
  func.func @transform_0(%arg0: i32, %arg1: i32) -> (i32, i32) {
    %c0_i32 = arith.constant 0 : i32
    %c0_i32_0 = arith.constant 0 : i32
    %c0_i32_1 = arith.constant 0 : i32
    return %c0_i32, %c0_i32_0 : i32, i32
  }
  func.func @transform_1(%arg0: i32, %arg1: i32) -> (i32, i32) {
    %c0_i32 = arith.constant 0 : i32
    %c0_i32_0 = arith.constant 0 : i32
    return %arg1, %c0_i32 : i32, i32
  }
  func.func @transform_2(%arg0: i32, %arg1: i32) -> (i32, i32) {
    %c0_i32 = arith.constant 0 : i32
    %c0_i32_0 = arith.constant 0 : i32
    return %arg0, %c0_i32 : i32, i32
  }
  func.func @transform_3(%arg0: i32, %arg1: i32) -> (i32, i32) {
    %c0_i32 = arith.constant 0 : i32
    return %arg0, %arg1 : i32, i32
  }
  func.func @transform_4(%arg0: i32, %arg1: i32) -> (i32, i32) {
    %c0_i32 = arith.constant 0 : i32
    %c0_i32_0 = arith.constant 0 : i32
    %c0_i32_1 = arith.constant 0 : i32
    return %c0_i32, %c0_i32_0 : i32, i32
  }
  func.func @transform_5(%arg0: i32, %arg1: i32) -> (i32, i32) {
    %c0_i32 = arith.constant 0 : i32
    %c0_i32_0 = arith.constant 0 : i32
    %c0_i32_1 = arith.constant 0 : i32
    return %c0_i32, %c0_i32_0 : i32, i32
  }
  func.func @transform_6(%arg0: i32, %arg1: i32) -> (i32, i32) {
    %c0_i32 = arith.constant 0 : i32
    %c0_i32_0 = arith.constant 0 : i32
    %c0_i32_1 = arith.constant 0 : i32
    return %c0_i32, %c0_i32_0 : i32, i32
  }
  func.func @transform_7(%arg0: i32, %arg1: i32) -> (i32, i32) {
    %c0_i32 = arith.constant 0 : i32
    %c0_i32_0 = arith.constant 0 : i32
    %c0_i32_1 = arith.constant 0 : i32
    return %c0_i32, %c0_i32_0 : i32, i32
  }
  func.func @transform_8(%arg0: i32, %arg1: i32) -> (i32, i32) {
    %c0_i32 = arith.constant 0 : i32
    %c0_i32_0 = arith.constant 0 : i32
    %c0_i32_1 = arith.constant 0 : i32
    return %c0_i32, %c0_i32_0 : i32, i32
  }
  func.func @transform_9(%arg0: i32, %arg1: i32) -> (i32, i32) {
    %c0_i32 = arith.constant 0 : i32
    %c0_i32_0 = arith.constant 0 : i32
    %c0_i32_1 = arith.constant 0 : i32
    return %c0_i32, %c0_i32_0 : i32, i32
  }
  func.func @transform_10(%arg0: i32, %arg1: i32) -> (i32, i32) {
    %c0_i32 = arith.constant 0 : i32
    %c0_i32_0 = arith.constant 0 : i32
    %c0_i32_1 = arith.constant 0 : i32
    return %c0_i32, %c0_i32_0 : i32, i32
  }
  func.func @transform_11(%arg0: i32, %arg1: i32) -> (i32, i32) {
    %c0_i32 = arith.constant 0 : i32
    %c0_i32_0 = arith.constant 0 : i32
    %c0_i32_1 = arith.constant 0 : i32
    return %c0_i32, %c0_i32_0 : i32, i32
  }
  func.func @transform_12(%arg0: i32, %arg1: i32) -> (i32, i32) {
    %c0_i32 = arith.constant 0 : i32
    %c0_i32_0 = arith.constant 0 : i32
    return %arg0, %c0_i32 : i32, i32
  }
}

module attributes {stable_mosaic.version = 11 : i64} {
  func.func @_ln_relu_kernel(%arg0: i32, %arg1: memref<32x32xf32, #tpu.memory_space<vmem>>, %arg2: memref<1x32xf32, #tpu.memory_space<vmem>>, %arg3: memref<1x32xf32, #tpu.memory_space<vmem>>, %arg4: memref<32x32xf32, #tpu.memory_space<vmem>>) attributes {dimension_semantics = [#tpu.dimension_semantics<parallel>], iteration_bounds = array<i64: 1>, scalar_prefetch = 0 : i64, scratch_operands = 0 : i64, tpu.core_type = #tpu.core_type<tc>, window_params = [{transform_indices = @transform_0, window_bounds = array<i64: 32, 32>}, {pipeline_mode = #tpu.pipeline_mode<synchronous>, transform_indices = @transform_1, window_bounds = array<i64: 1, 32>}, {pipeline_mode = #tpu.pipeline_mode<synchronous>, transform_indices = @transform_2, window_bounds = array<i64: 1, 32>}, {transform_indices = @transform_3, window_bounds = array<i64: 32, 32>}]} {
    %c0 = arith.constant 0 : index
    %c0_0 = arith.constant 0 : index
    %0 = vector.load %arg1[%c0, %c0_0] : memref<32x32xf32, #tpu.memory_space<vmem>>, vector<32x32xf32>
    %c0_1 = arith.constant 0 : index
    %c0_2 = arith.constant 0 : index
    %1 = vector.load %arg2[%c0_1, %c0_2] : memref<1x32xf32, #tpu.memory_space<vmem>>, vector<1x32xf32>
    %c0_3 = arith.constant 0 : index
    %c0_4 = arith.constant 0 : index
    %2 = vector.load %arg3[%c0_3, %c0_4] : memref<1x32xf32, #tpu.memory_space<vmem>>, vector<1x32xf32>
    %cst = arith.constant dense<0.000000e+00> : vector<32xf32>
    %3 = vector.multi_reduction <add>, %0, %cst [1] : vector<32x32xf32> to vector<32xf32>
    %4 = vector.shape_cast %3 : vector<32xf32> to vector<32x1xf32>
    %cst_5 = arith.constant 3.200000e+01 : f32
    %5 = vector.broadcast %cst_5 : f32 to vector<32x1xf32>
    %6 = arith.divf %4, %5 : vector<32x1xf32>
    %7 = vector.broadcast %6 : vector<32x1xf32> to vector<32x32xf32>
    %8 = arith.subf %0, %7 : vector<32x32xf32>
    %9 = vector.broadcast %6 : vector<32x1xf32> to vector<32x32xf32>
    %10 = arith.subf %0, %9 : vector<32x32xf32>
    %11 = arith.mulf %8, %10 : vector<32x32xf32>
    %cst_6 = arith.constant dense<0.000000e+00> : vector<32xf32>
    %12 = vector.multi_reduction <add>, %11, %cst_6 [1] : vector<32x32xf32> to vector<32xf32>
    %13 = vector.shape_cast %12 : vector<32xf32> to vector<32x1xf32>
    %cst_7 = arith.constant 3.200000e+01 : f32
    %14 = vector.broadcast %cst_7 : f32 to vector<32x1xf32>
    %15 = arith.divf %13, %14 : vector<32x1xf32>
    %16 = vector.broadcast %6 : vector<32x1xf32> to vector<32x32xf32>
    %17 = arith.subf %0, %16 : vector<32x32xf32>
    %cst_8 = arith.constant 9.99999974E-6 : f32
    %18 = vector.broadcast %cst_8 : f32 to vector<32x1xf32>
    %19 = arith.addf %15, %18 : vector<32x1xf32>
    %20 = math.rsqrt %19 : vector<32x1xf32>
    %21 = vector.broadcast %20 : vector<32x1xf32> to vector<32x32xf32>
    %22 = arith.mulf %17, %21 : vector<32x32xf32>
    %23 = vector.broadcast %1 : vector<1x32xf32> to vector<32x32xf32>
    %24 = arith.mulf %22, %23 : vector<32x32xf32>
    %25 = vector.broadcast %2 : vector<1x32xf32> to vector<32x32xf32>
    %26 = arith.addf %24, %25 : vector<32x32xf32>
    %cst_9 = arith.constant 0.000000e+00 : f32
    %27 = vector.broadcast %cst_9 : f32 to vector<32x32xf32>
    %28 = arith.maximumf %26, %27 : vector<32x32xf32>
    %c0_10 = arith.constant 0 : index
    %c0_11 = arith.constant 0 : index
    %29 = vector.load %arg4[%c0_10, %c0_11] : memref<32x32xf32, #tpu.memory_space<vmem>>, vector<32x32xf32>
    tpu.vector_store %arg4[%c0_10, %c0_11], %28 {strides = array<i32>} : memref<32x32xf32, #tpu.memory_space<vmem>>, vector<32x32xf32>,
    return
  }
  func.func @transform_0(%arg0: i32) -> (i32, i32) {
    %c0_i32 = arith.constant 0 : i32
    %c0_i32_0 = arith.constant 0 : i32
    return %arg0, %c0_i32 : i32, i32
  }
  func.func @transform_1(%arg0: i32) -> (i32, i32) {
    %c0_i32 = arith.constant 0 : i32
    %c0_i32_0 = arith.constant 0 : i32
    %c0_i32_1 = arith.constant 0 : i32
    return %c0_i32, %c0_i32_0 : i32, i32
  }
  func.func @transform_2(%arg0: i32) -> (i32, i32) {
    %c0_i32 = arith.constant 0 : i32
    %c0_i32_0 = arith.constant 0 : i32
    %c0_i32_1 = arith.constant 0 : i32
    return %c0_i32, %c0_i32_0 : i32, i32
  }
  func.func @transform_3(%arg0: i32) -> (i32, i32) {
    %c0_i32 = arith.constant 0 : i32
    %c0_i32_0 = arith.constant 0 : i32
    return %arg0, %c0_i32 : i32, i32
  }
}

module attributes {stable_mosaic.version = 11 : i64} {
  func.func @_gen_layer_kernel(%arg0: i32, %arg1: i32, %arg2: memref<1x1xf32, #tpu.memory_space<smem>>, %arg3: memref<32x32xf32, #tpu.memory_space<vmem>>, %arg4: memref<32x32xf32, #tpu.memory_space<vmem>>, %arg5: memref<32x32xbf16, #tpu.memory_space<vmem>>, %arg6: memref<1x32xf32, #tpu.memory_space<vmem>>, %arg7: memref<1x32xf32, #tpu.memory_space<vmem>>, %arg8: memref<32x64xf32, #tpu.memory_space<vmem>>, %arg9: memref<1x64xf32, #tpu.memory_space<vmem>>, %arg10: memref<1x64xf32, #tpu.memory_space<vmem>>, %arg11: memref<1x64xf32, #tpu.memory_space<vmem>>, %arg12: memref<64x32xf32, #tpu.memory_space<vmem>>, %arg13: memref<1x32xf32, #tpu.memory_space<vmem>>, %arg14: memref<32x32xf32, #tpu.memory_space<vmem>>, %arg15: memref<32x64xf32, #tpu.memory_space<vmem>>, %arg16: memref<1x32xf32, #tpu.memory_space<vmem>>) attributes {dimension_semantics = [#tpu.dimension_semantics<parallel>, #tpu.dimension_semantics<arbitrary>], iteration_bounds = array<i64: 1, 1>, scalar_prefetch = 0 : i64, scratch_operands = 2 : i64, tpu.core_type = #tpu.core_type<tc>, window_params = [{transform_indices = @transform_0, window_bounds = array<i64: 1, 1>}, {transform_indices = @transform_1, window_bounds = array<i64: 32, 32>}, {transform_indices = @transform_2, window_bounds = array<i64: 32, 32>}, {transform_indices = @transform_3, window_bounds = array<i64: 32, 32>}, {pipeline_mode = #tpu.pipeline_mode<synchronous>, transform_indices = @transform_4, window_bounds = array<i64: 1, 32>}, {pipeline_mode = #tpu.pipeline_mode<synchronous>, transform_indices = @transform_5, window_bounds = array<i64: 1, 32>}, {pipeline_mode = #tpu.pipeline_mode<synchronous>, transform_indices = @transform_6, window_bounds = array<i64: 32, 64>}, {pipeline_mode = #tpu.pipeline_mode<synchronous>, transform_indices = @transform_7, window_bounds = array<i64: 1, 64>}, {pipeline_mode = #tpu.pipeline_mode<synchronous>, transform_indices = @transform_8, window_bounds = array<i64: 1, 64>}, {pipeline_mode = #tpu.pipeline_mode<synchronous>, transform_indices = @transform_9, window_bounds = array<i64: 1, 64>}, {pipeline_mode = #tpu.pipeline_mode<synchronous>, transform_indices = @transform_10, window_bounds = array<i64: 64, 32>}, {pipeline_mode = #tpu.pipeline_mode<synchronous>, transform_indices = @transform_11, window_bounds = array<i64: 1, 32>}, {transform_indices = @transform_12, window_bounds = array<i64: 32, 32>}]} {
    %c0_i32 = arith.constant 0 : i32
    %0 = arith.cmpi eq, %arg1, %c0_i32 : i32
    %1 = arith.extui %0 : i1 to i32
    %c0_i32_0 = arith.constant 0 : i32
    %2 = arith.cmpi ne, %1, %c0_i32_0 : i32
    scf.if %2 {
      %cst_29 = arith.constant 0.000000e+00 : f32
      %63 = vector.broadcast %cst_29 : f32 to vector<32x64xf32>
      %c0_30 = arith.constant 0 : index
      %c0_31 = arith.constant 0 : index
      %64 = vector.load %arg15[%c0_30, %c0_31] : memref<32x64xf32, #tpu.memory_space<vmem>>, vector<32x64xf32>
      tpu.vector_store %arg15[%c0_30, %c0_31], %63 {strides = array<i32>} : memref<32x64xf32, #tpu.memory_space<vmem>>, vector<32x64xf32>,
      %cst_32 = arith.constant 0xFF800000 : f32
      %65 = vector.broadcast %cst_32 : f32 to vector<1x32xf32>
      %c0_33 = arith.constant 0 : index
      %c0_34 = arith.constant 0 : index
      %66 = vector.load %arg16[%c0_33, %c0_34] : memref<1x32xf32, #tpu.memory_space<vmem>>, vector<1x32xf32>
      tpu.vector_store %arg16[%c0_33, %c0_34], %65 {strides = array<i32>} : memref<1x32xf32, #tpu.memory_space<vmem>>, vector<1x32xf32>,
    } else {
    }
    %c0 = arith.constant 0 : index
    %c0_1 = arith.constant 0 : index
    %3 = memref.load %arg2[%c0, %c0_1] : memref<1x1xf32, #tpu.memory_space<smem>>
    %c0_2 = arith.constant 0 : index
    %c0_3 = arith.constant 0 : index
    %4 = vector.load %arg3[%c0_2, %c0_3] : memref<32x32xf32, #tpu.memory_space<vmem>>, vector<32x32xf32>
    %c0_4 = arith.constant 0 : index
    %c0_5 = arith.constant 0 : index
    %5 = vector.load %arg6[%c0_4, %c0_5] : memref<1x32xf32, #tpu.memory_space<vmem>>, vector<1x32xf32>
    %c0_6 = arith.constant 0 : index
    %c0_7 = arith.constant 0 : index
    %6 = vector.load %arg7[%c0_6, %c0_7] : memref<1x32xf32, #tpu.memory_space<vmem>>, vector<1x32xf32>
    %cst = arith.constant dense<0.000000e+00> : vector<32xf32>
    %7 = vector.multi_reduction <add>, %4, %cst [1] : vector<32x32xf32> to vector<32xf32>
    %8 = vector.shape_cast %7 : vector<32xf32> to vector<32x1xf32>
    %cst_8 = arith.constant 3.200000e+01 : f32
    %9 = vector.broadcast %cst_8 : f32 to vector<32x1xf32>
    %10 = arith.divf %8, %9 : vector<32x1xf32>
    %11 = vector.broadcast %10 : vector<32x1xf32> to vector<32x32xf32>
    %12 = arith.subf %4, %11 : vector<32x32xf32>
    %13 = vector.broadcast %10 : vector<32x1xf32> to vector<32x32xf32>
    %14 = arith.subf %4, %13 : vector<32x32xf32>
    %15 = arith.mulf %12, %14 : vector<32x32xf32>
    %cst_9 = arith.constant dense<0.000000e+00> : vector<32xf32>
    %16 = vector.multi_reduction <add>, %15, %cst_9 [1] : vector<32x32xf32> to vector<32xf32>
    %17 = vector.shape_cast %16 : vector<32xf32> to vector<32x1xf32>
    %cst_10 = arith.constant 3.200000e+01 : f32
    %18 = vector.broadcast %cst_10 : f32 to vector<32x1xf32>
    %19 = arith.divf %17, %18 : vector<32x1xf32>
    %20 = vector.broadcast %10 : vector<32x1xf32> to vector<32x32xf32>
    %21 = arith.subf %4, %20 : vector<32x32xf32>
    %cst_11 = arith.constant 9.99999974E-6 : f32
    %22 = vector.broadcast %cst_11 : f32 to vector<32x1xf32>
    %23 = arith.addf %19, %22 : vector<32x1xf32>
    %24 = math.rsqrt %23 : vector<32x1xf32>
    %25 = vector.broadcast %24 : vector<32x1xf32> to vector<32x32xf32>
    %26 = arith.mulf %21, %25 : vector<32x32xf32>
    %27 = vector.broadcast %5 : vector<1x32xf32> to vector<32x32xf32>
    %28 = arith.mulf %26, %27 : vector<32x32xf32>
    %29 = vector.broadcast %6 : vector<1x32xf32> to vector<32x32xf32>
    %30 = arith.addf %28, %29 : vector<32x32xf32>
    %cst_12 = arith.constant 0.000000e+00 : f32
    %31 = vector.broadcast %cst_12 : f32 to vector<32x32xf32>
    %32 = arith.maximumf %30, %31 : vector<32x32xf32>
    %cst_13 = arith.constant 0.000000e+00 : f32
    %33 = vector.broadcast %cst_13 : f32 to vector<32x32xf32>
    %34 = arith.maximumf %32, %33 : vector<32x32xf32>
    %cst_14 = arith.constant 1.000000e-07 : f32
    %35 = vector.broadcast %cst_14 : f32 to vector<32x32xf32>
    %36 = arith.addf %34, %35 : vector<32x32xf32>
    %37 = vector.broadcast %3 : f32 to vector<32x32xf32>
    %38 = arith.mulf %37, %36 : vector<32x32xf32>
    %c0_15 = arith.constant 0 : index
    %c0_16 = arith.constant 0 : index
    %39 = vector.load %arg16[%c0_15, %c0_16] : memref<1x32xf32, #tpu.memory_space<vmem>>, vector<1x32xf32>
    %cst_17 = arith.constant dense<0xFF800000> : vector<32xf32>
    %40 = vector.multi_reduction <maximumf>, %38, %cst_17 [0] : vector<32x32xf32> to vector<32xf32>
    %41 = vector.shape_cast %40 : vector<32xf32> to vector<1x32xf32>
    %42 = arith.maximumf %39, %41 : vector<1x32xf32>
    %43 = arith.subf %39, %42 : vector<1x32xf32>
    %44 = math.exp %43 : vector<1x32xf32>
    %45 = vector.broadcast %42 : vector<1x32xf32> to vector<32x32xf32>
    %46 = arith.subf %38, %45 : vector<32x32xf32>
    %47 = math.exp %46 : vector<32x32xf32>
    %48 = arith.mulf %47, %36 : vector<32x32xf32>
    %49 = tpu.concatenate %48, %47 in 1 : vector<32x32xf32>, vector<32x32xf32> -> vector<32x64xf32>
    %50 = arith.truncf %49 : vector<32x64xf32> to vector<32x64xbf16>
    %c0_18 = arith.constant 0 : index
    %c0_19 = arith.constant 0 : index
    %51 = vector.load %arg5[%c0_18, %c0_19] : memref<32x32xbf16, #tpu.memory_space<vmem>>, vector<32x32xbf16>
    %cst_20 = arith.constant dense<0.000000e+00> : vector<32x64xf32>
    %52 = tpu.matmul %51, %50, %cst_20 {dimension_numbers = #tpu.dot_dimension_numbers<[1], [0], [0], [1], [0, 0, 1, 1], [], []>} : vector<32x32xbf16>, vector<32x64xbf16>, vector<32x64xf32> -> vector<32x64xf32>
    %c0_21 = arith.constant 0 : index
    %c0_22 = arith.constant 0 : index
    %53 = vector.load %arg15[%c0_21, %c0_22] : memref<32x64xf32, #tpu.memory_space<vmem>>, vector<32x64xf32>
    %54 = tpu.concatenate %44, %44 in 1 : vector<1x32xf32>, vector<1x32xf32> -> vector<1x64xf32>
    %55 = vector.broadcast %54 : vector<1x64xf32> to vector<32x64xf32>
    %56 = arith.mulf %53, %55 : vector<32x64xf32>
    %57 = arith.addf %56, %52 : vector<32x64xf32>
    %c0_23 = arith.constant 0 : index
    %c0_24 = arith.constant 0 : index
    %58 = vector.load %arg15[%c0_23, %c0_24] : memref<32x64xf32, #tpu.memory_space<vmem>>, vector<32x64xf32>
    tpu.vector_store %arg15[%c0_23, %c0_24], %57 {strides = array<i32>} : memref<32x64xf32, #tpu.memory_space<vmem>>, vector<32x64xf32>,
    %c0_25 = arith.constant 0 : index
    %c0_26 = arith.constant 0 : index
    %59 = vector.load %arg16[%c0_25, %c0_26] : memref<1x32xf32, #tpu.memory_space<vmem>>, vector<1x32xf32>
    tpu.vector_store %arg16[%c0_25, %c0_26], %42 {strides = array<i32>} : memref<1x32xf32, #tpu.memory_space<vmem>>, vector<1x32xf32>,
    %c0_i32_27 = arith.constant 0 : i32
    %60 = arith.cmpi eq, %arg1, %c0_i32_27 : i32
    %61 = arith.extui %60 : i1 to i32
    %c0_i32_28 = arith.constant 0 : i32
    %62 = arith.cmpi ne, %61, %c0_i32_28 : i32
    scf.if %62 {
      %c0_29 = arith.constant 0 : index
      %c0_30 = arith.constant 0 : index
      %63 = vector.load %arg4[%c0_29, %c0_30] : memref<32x32xf32, #tpu.memory_space<vmem>>, vector<32x32xf32>
      %c0_31 = arith.constant 0 : index
      %c0_32 = arith.constant 0 : index
      %64 = vector.load %arg6[%c0_31, %c0_32] : memref<1x32xf32, #tpu.memory_space<vmem>>, vector<1x32xf32>
      %c0_33 = arith.constant 0 : index
      %c0_34 = arith.constant 0 : index
      %65 = vector.load %arg7[%c0_33, %c0_34] : memref<1x32xf32, #tpu.memory_space<vmem>>, vector<1x32xf32>
      %cst_35 = arith.constant dense<0.000000e+00> : vector<32xf32>
      %66 = vector.multi_reduction <add>, %63, %cst_35 [1] : vector<32x32xf32> to vector<32xf32>
      %67 = vector.shape_cast %66 : vector<32xf32> to vector<32x1xf32>
      %cst_36 = arith.constant 3.200000e+01 : f32
      %68 = vector.broadcast %cst_36 : f32 to vector<32x1xf32>
      %69 = arith.divf %67, %68 : vector<32x1xf32>
      %70 = vector.broadcast %69 : vector<32x1xf32> to vector<32x32xf32>
      %71 = arith.subf %63, %70 : vector<32x32xf32>
      %72 = vector.broadcast %69 : vector<32x1xf32> to vector<32x32xf32>
      %73 = arith.subf %63, %72 : vector<32x32xf32>
      %74 = arith.mulf %71, %73 : vector<32x32xf32>
      %cst_37 = arith.constant dense<0.000000e+00> : vector<32xf32>
      %75 = vector.multi_reduction <add>, %74, %cst_37 [1] : vector<32x32xf32> to vector<32xf32>
      %76 = vector.shape_cast %75 : vector<32xf32> to vector<32x1xf32>
      %cst_38 = arith.constant 3.200000e+01 : f32
      %77 = vector.broadcast %cst_38 : f32 to vector<32x1xf32>
      %78 = arith.divf %76, %77 : vector<32x1xf32>
      %79 = vector.broadcast %69 : vector<32x1xf32> to vector<32x32xf32>
      %80 = arith.subf %63, %79 : vector<32x32xf32>
      %cst_39 = arith.constant 9.99999974E-6 : f32
      %81 = vector.broadcast %cst_39 : f32 to vector<32x1xf32>
      %82 = arith.addf %78, %81 : vector<32x1xf32>
      %83 = math.rsqrt %82 : vector<32x1xf32>
      %84 = vector.broadcast %83 : vector<32x1xf32> to vector<32x32xf32>
      %85 = arith.mulf %80, %84 : vector<32x32xf32>
      %86 = vector.broadcast %64 : vector<1x32xf32> to vector<32x32xf32>
      %87 = arith.mulf %85, %86 : vector<32x32xf32>
      %88 = vector.broadcast %65 : vector<1x32xf32> to vector<32x32xf32>
      %89 = arith.addf %87, %88 : vector<32x32xf32>
      %cst_40 = arith.constant 0.000000e+00 : f32
      %90 = vector.broadcast %cst_40 : f32 to vector<32x32xf32>
      %91 = arith.maximumf %89, %90 : vector<32x32xf32>
      %c0_41 = arith.constant 0 : index
      %c0_42 = arith.constant 0 : index
      %92 = vector.load %arg15[%c0_41, %c0_42] : memref<32x64xf32, #tpu.memory_space<vmem>>, vector<32x64xf32>
      %93 = vector.extract_strided_slice %92 {offsets = [0, 0], sizes = [32, 32], strides = [1, 1]} : vector<32x64xf32> to vector<32x32xf32>
      %94 = vector.extract_strided_slice %92 {offsets = [0, 32], sizes = [32, 32], strides = [1, 1]} : vector<32x64xf32> to vector<32x32xf32>
      %cst_43 = arith.constant 0.000000e+00 : f32
      %95 = vector.broadcast %cst_43 : f32 to vector<32x32xf32>
      %96 = arith.cmpf ogt, %94, %95 : vector<32x32xf32>
      %97 = tpu.reciprocal %94 {approx = true} : vector<32x32xf32> -> vector<32x32xf32>
      %cst_44 = arith.constant 0.000000e+00 : f32
      %98 = vector.broadcast %cst_44 : f32 to vector<32x32xf32>
      %99 = arith.select %96, %97, %98 : vector<32x32xi1>, vector<32x32xf32>
      %100 = arith.mulf %93, %99 : vector<32x32xf32>
      %101 = arith.addf %100, %91 : vector<32x32xf32>
      %c0_45 = arith.constant 0 : index
      %c0_46 = arith.constant 0 : index
      %102 = vector.load %arg8[%c0_45, %c0_46] : memref<32x64xf32, #tpu.memory_space<vmem>>, vector<32x64xf32>
      %cst_47 = arith.constant dense<0.000000e+00> : vector<32x64xf32>
      %103 = tpu.matmul %101, %102, %cst_47 {dimension_numbers = #tpu.dot_dimension_numbers<[1], [0], [0], [1], [0, 0, 1, 1], [], []>} : vector<32x32xf32>, vector<32x64xf32>, vector<32x64xf32> -> vector<32x64xf32>
      %c0_48 = arith.constant 0 : index
      %c0_49 = arith.constant 0 : index
      %104 = vector.load %arg9[%c0_48, %c0_49] : memref<1x64xf32, #tpu.memory_space<vmem>>, vector<1x64xf32>
      %105 = vector.broadcast %104 : vector<1x64xf32> to vector<32x64xf32>
      %106 = arith.addf %103, %105 : vector<32x64xf32>
      %c0_50 = arith.constant 0 : index
      %c0_51 = arith.constant 0 : index
      %107 = vector.load %arg10[%c0_50, %c0_51] : memref<1x64xf32, #tpu.memory_space<vmem>>, vector<1x64xf32>
      %c0_52 = arith.constant 0 : index
      %c0_53 = arith.constant 0 : index
      %108 = vector.load %arg11[%c0_52, %c0_53] : memref<1x64xf32, #tpu.memory_space<vmem>>, vector<1x64xf32>
      %cst_54 = arith.constant dense<0.000000e+00> : vector<32xf32>
      %109 = vector.multi_reduction <add>, %106, %cst_54 [1] : vector<32x64xf32> to vector<32xf32>
      %110 = vector.shape_cast %109 : vector<32xf32> to vector<32x1xf32>
      %cst_55 = arith.constant 6.400000e+01 : f32
      %111 = vector.broadcast %cst_55 : f32 to vector<32x1xf32>
      %112 = arith.divf %110, %111 : vector<32x1xf32>
      %113 = vector.broadcast %112 : vector<32x1xf32> to vector<32x64xf32>
      %114 = arith.subf %106, %113 : vector<32x64xf32>
      %115 = vector.broadcast %112 : vector<32x1xf32> to vector<32x64xf32>
      %116 = arith.subf %106, %115 : vector<32x64xf32>
      %117 = arith.mulf %114, %116 : vector<32x64xf32>
      %cst_56 = arith.constant dense<0.000000e+00> : vector<32xf32>
      %118 = vector.multi_reduction <add>, %117, %cst_56 [1] : vector<32x64xf32> to vector<32xf32>
      %119 = vector.shape_cast %118 : vector<32xf32> to vector<32x1xf32>
      %cst_57 = arith.constant 6.400000e+01 : f32
      %120 = vector.broadcast %cst_57 : f32 to vector<32x1xf32>
      %121 = arith.divf %119, %120 : vector<32x1xf32>
      %122 = vector.broadcast %112 : vector<32x1xf32> to vector<32x64xf32>
      %123 = arith.subf %106, %122 : vector<32x64xf32>
      %cst_58 = arith.constant 9.99999974E-6 : f32
      %124 = vector.broadcast %cst_58 : f32 to vector<32x1xf32>
      %125 = arith.addf %121, %124 : vector<32x1xf32>
      %126 = math.rsqrt %125 : vector<32x1xf32>
      %127 = vector.broadcast %126 : vector<32x1xf32> to vector<32x64xf32>
      %128 = arith.mulf %123, %127 : vector<32x64xf32>
      %129 = vector.broadcast %107 : vector<1x64xf32> to vector<32x64xf32>
      %130 = arith.mulf %128, %129 : vector<32x64xf32>
      %131 = vector.broadcast %108 : vector<1x64xf32> to vector<32x64xf32>
      %132 = arith.addf %130, %131 : vector<32x64xf32>
      %cst_59 = arith.constant 0.000000e+00 : f32
      %133 = vector.broadcast %cst_59 : f32 to vector<32x64xf32>
      %134 = arith.maximumf %132, %133 : vector<32x64xf32>
      %c0_60 = arith.constant 0 : index
      %c0_61 = arith.constant 0 : index
      %135 = vector.load %arg12[%c0_60, %c0_61] : memref<64x32xf32, #tpu.memory_space<vmem>>, vector<64x32xf32>
      %cst_62 = arith.constant dense<0.000000e+00> : vector<32x32xf32>
      %136 = tpu.matmul %134, %135, %cst_62 {dimension_numbers = #tpu.dot_dimension_numbers<[1], [0], [0], [1], [0, 0, 1, 1], [], []>} : vector<32x64xf32>, vector<64x32xf32>, vector<32x32xf32> -> vector<32x32xf32>
      %c0_63 = arith.constant 0 : index
      %c0_64 = arith.constant 0 : index
      %137 = vector.load %arg13[%c0_63, %c0_64] : memref<1x32xf32, #tpu.memory_space<vmem>>, vector<1x32xf32>
      %138 = vector.broadcast %137 : vector<1x32xf32> to vector<32x32xf32>
      %139 = arith.addf %136, %138 : vector<32x32xf32>
      %140 = arith.addf %139, %63 : vector<32x32xf32>
      %c0_65 = arith.constant 0 : index
      %c0_66 = arith.constant 0 : index
      %141 = vector.load %arg14[%c0_65, %c0_66] : memref<32x32xf32, #tpu.memory_space<vmem>>, vector<32x32xf32>
      tpu.vector_store %arg14[%c0_65, %c0_66], %140 {strides = array<i32>} : memref<32x32xf32, #tpu.memory_space<vmem>>, vector<32x32xf32>,
    } else {
    }
    return
  }
  func.func @transform_0(%arg0: i32, %arg1: i32) -> (i32, i32) {
    %c0_i32 = arith.constant 0 : i32
    %c0_i32_0 = arith.constant 0 : i32
    %c0_i32_1 = arith.constant 0 : i32
    return %c0_i32, %c0_i32_0 : i32, i32
  }
  func.func @transform_1(%arg0: i32, %arg1: i32) -> (i32, i32) {
    %c0_i32 = arith.constant 0 : i32
    %c0_i32_0 = arith.constant 0 : i32
    return %arg1, %c0_i32 : i32, i32
  }
  func.func @transform_2(%arg0: i32, %arg1: i32) -> (i32, i32) {
    %c0_i32 = arith.constant 0 : i32
    %c0_i32_0 = arith.constant 0 : i32
    return %arg0, %c0_i32 : i32, i32
  }
  func.func @transform_3(%arg0: i32, %arg1: i32) -> (i32, i32) {
    %c0_i32 = arith.constant 0 : i32
    return %arg0, %arg1 : i32, i32
  }
  func.func @transform_4(%arg0: i32, %arg1: i32) -> (i32, i32) {
    %c0_i32 = arith.constant 0 : i32
    %c0_i32_0 = arith.constant 0 : i32
    %c0_i32_1 = arith.constant 0 : i32
    return %c0_i32, %c0_i32_0 : i32, i32
  }
  func.func @transform_5(%arg0: i32, %arg1: i32) -> (i32, i32) {
    %c0_i32 = arith.constant 0 : i32
    %c0_i32_0 = arith.constant 0 : i32
    %c0_i32_1 = arith.constant 0 : i32
    return %c0_i32, %c0_i32_0 : i32, i32
  }
  func.func @transform_6(%arg0: i32, %arg1: i32) -> (i32, i32) {
    %c0_i32 = arith.constant 0 : i32
    %c0_i32_0 = arith.constant 0 : i32
    %c0_i32_1 = arith.constant 0 : i32
    return %c0_i32, %c0_i32_0 : i32, i32
  }
  func.func @transform_7(%arg0: i32, %arg1: i32) -> (i32, i32) {
    %c0_i32 = arith.constant 0 : i32
    %c0_i32_0 = arith.constant 0 : i32
    %c0_i32_1 = arith.constant 0 : i32
    return %c0_i32, %c0_i32_0 : i32, i32
  }
  func.func @transform_8(%arg0: i32, %arg1: i32) -> (i32, i32) {
    %c0_i32 = arith.constant 0 : i32
    %c0_i32_0 = arith.constant 0 : i32
    %c0_i32_1 = arith.constant 0 : i32
    return %c0_i32, %c0_i32_0 : i32, i32
  }
  func.func @transform_9(%arg0: i32, %arg1: i32) -> (i32, i32) {
    %c0_i32 = arith.constant 0 : i32
    %c0_i32_0 = arith.constant 0 : i32
    %c0_i32_1 = arith.constant 0 : i32
    return %c0_i32, %c0_i32_0 : i32, i32
  }
  func.func @transform_10(%arg0: i32, %arg1: i32) -> (i32, i32) {
    %c0_i32 = arith.constant 0 : i32
    %c0_i32_0 = arith.constant 0 : i32
    %c0_i32_1 = arith.constant 0 : i32
    return %c0_i32, %c0_i32_0 : i32, i32
  }
  func.func @transform_11(%arg0: i32, %arg1: i32) -> (i32, i32) {
    %c0_i32 = arith.constant 0 : i32
    %c0_i32_0 = arith.constant 0 : i32
    %c0_i32_1 = arith.constant 0 : i32
    return %c0_i32, %c0_i32_0 : i32, i32
  }
  func.func @transform_12(%arg0: i32, %arg1: i32) -> (i32, i32) {
    %c0_i32 = arith.constant 0 : i32
    %c0_i32_0 = arith.constant 0 : i32
    return %arg0, %c0_i32 : i32, i32
  }
}

</mosaic_0001>

<llo_original>
// kernel: deeper_gcn_forward.7
$region0: #{deeper_gcn_forward.7}
  #allocation0 [shape = 'u32[]', space=smem, size = 0x4, offset = 0x4, fixed_abs, tag = 'smem constant byte address 0x4 - core index']
  #allocation1 [shape = 'u32[72,128]{1,0:T(1,128)}', space=vmem, size = 0x9000, scoped, tag = 'internal scratch']
  %s0 = inlined_call_operand.vmem [shape: f32[32,32], index: 0, kind: input, shape index: {}]
  %s1 = inlined_call_operand.vmem [shape: f32[1,32], index: 1, kind: input, shape index: {}]
  %s2 = inlined_call_operand.vmem [shape: f32[1,32], index: 2, kind: input, shape index: {}]
  %s3 = inlined_call_operand.hbm [shape: f32[32,32], index: 3, kind: output, shape index: {}]
  %s4 = sld [smem:[#allocation0]]
  $region22: #{deeper_gcn_forward.7} parent=0
    _
  %s6 = ssub.s32 1, %s4
  %s7 = scalar_select 0, %s6, %s4
  $region1: #{deeper_gcn_forward.7} parent=0
    #allocation2 [shape = 'u8[16384]{0}', space=vmem, size = 0x4000, scoped, tag = 'output window, operand 0, single buffered']
    #allocation3 [shape = 's32[1]{0}', space=sflag, size = 0x4, scoped, tag = 'scoped memory for deeper_gcn_forward.7']
    %8 = vsyncpa [#allocation3], 0
    // Predicated region
    $region2: #{deeper_gcn_forward.7} parent=1 // pred_check
      _
    $region3: #{deeper_gcn_forward.7} parent=1 // pred_check_branch
      %10 = sbr.rel (0) target = $region5
    $region4: #{deeper_gcn_forward.7} parent=1 // pred_region
      _
    $region5: #{deeper_gcn_forward.7} parent=1 // pred_fallthru
      _
    // Predicated region
    $region6: #{deeper_gcn_forward.7} parent=1 // pred_check
      _
    $region7: #{deeper_gcn_forward.7} parent=1 // pred_check_branch
      %12 = sbr.rel (0) target = $region9
    $region8: #{deeper_gcn_forward.7} parent=1 // pred_region
      _
    $region9: #{deeper_gcn_forward.7} parent=1 // pred_fallthru
      _
    // Predicated region
    $region10: #{deeper_gcn_forward.7} parent=1 // pred_check
      _
    $region11: #{deeper_gcn_forward.7} parent=1 // pred_check_branch
      %14 = sbr.rel (0) target = $region13
    $region12: #{deeper_gcn_forward.7} parent=1 // pred_region
      _
    $region13: #{deeper_gcn_forward.7} parent=1 // pred_fallthru
      _
    %v15 = vld [vmem:[%s0] sm:$0xff]
    %v16 = vld [vmem:[%s0 + $0x8] sm:$0xff]
    %v17 = vld [vmem:[%s0 + $0x10] sm:$0xff]
    %v18 = vld [vmem:[%s0 + $0x18] sm:$0xff]
    %v19 = vld [vmem:[%s1] sm:$0x1]
    %v20 = vld [vmem:[%s2] sm:$0x1]
    %vm21 = vcmask 261120
    %v22 = vsel %vm21, %v15, 0.0
    %23 = vadd.xlane.f32.xlu0 %v22
    %v24 = vpop.xlane.xlu0 %23
    %v25 = vsel %vm21, %v16, 0.0
    %26 = vadd.xlane.f32.xlu0 %v25
    %v27 = vpop.xlane.xlu0 %26
    %v28 = vsel %vm21, %v17, 0.0
    %29 = vadd.xlane.f32.xlu0 %v28
    %v30 = vpop.xlane.xlu0 %29
    %v31 = vsel %vm21, %v18, 0.0
    %32 = vadd.xlane.f32.xlu0 %v31
    %v33 = vpop.xlane.xlu0 %32
    %v34 = vrcp.pop 32.0
    %v35 = vmul.f32 32.0, %v34
    %v36 = vsub.f32 1.0, %v35
    %v37 = vmul.f32 %v34, %v36
    %v38 = vadd.f32 %v34, %v37
    %vm39 = vweird.f32 %v34
    %v40 = vsel %vm39, %v34, %v38
    %v41 = vmul.f32 %v24, %v40
    %v42 = vmul.f32 %v27, %v40
    %v43 = vmul.f32 %v30, %v40
    %v44 = vmul.f32 %v33, %v40
    %v45 = vsub.f32 %v15, %v41
    %v46 = vsub.f32 %v16, %v42
    %v47 = vsub.f32 %v17, %v43
    %v48 = vsub.f32 %v18, %v44
    %v49 = vmul.f32 %v45, %v45
    %v50 = vmul.f32 %v46, %v46
    %v51 = vmul.f32 %v47, %v47
    %v52 = vmul.f32 %v48, %v48
    %v53 = vsel %vm21, %v49, 0.0
    %54 = vadd.xlane.f32.xlu0 %v53
    %v55 = vpop.xlane.xlu0 %54
    %v56 = vsel %vm21, %v50, 0.0
    %57 = vadd.xlane.f32.xlu0 %v56
    %v58 = vpop.xlane.xlu0 %57
    %v59 = vsel %vm21, %v51, 0.0
    %60 = vadd.xlane.f32.xlu0 %v59
    %v61 = vpop.xlane.xlu0 %60
    %v62 = vsel %vm21, %v52, 0.0
    %63 = vadd.xlane.f32.xlu0 %v62
    %v64 = vpop.xlane.xlu0 %63
    %v65 = vmul.f32 %v55, %v40
    %v66 = vmul.f32 %v58, %v40
    %v67 = vmul.f32 %v61, %v40
    %v68 = vmul.f32 %v64, %v40
    %v69 = vadd.f32 %v65, 1e-05
    %v70 = vadd.f32 %v66, 1e-05
    %v71 = vadd.f32 %v67, 1e-05
    %v72 = vadd.f32 %v68, 1e-05
    %v73 = vrsqrt.pop %v69
    %v74 = vmul.f32 %v73, %v69
    %v75 = vmul.f32 %v74, %v73
    %v76 = vmul.f32 0.5, %v75
    %v77 = vsub.f32 1.5, %v76
    %v78 = vmul.f32 %v73, %v77
    %vm79 = vweird.f32 %v69
    %vm80 = vweird.f32 %v73
    %vm81 = vmor %vm79, %vm80
    %v82 = vsel %vm81, %v73, %v78
    %v83 = vrsqrt.pop %v70
    %v84 = vmul.f32 %v83, %v70
    %v85 = vmul.f32 %v84, %v83
    %v86 = vmul.f32 0.5, %v85
    %v87 = vsub.f32 1.5, %v86
    %v88 = vmul.f32 %v83, %v87
    %vm89 = vweird.f32 %v70
    %vm90 = vweird.f32 %v83
    %vm91 = vmor %vm89, %vm90
    %v92 = vsel %vm91, %v83, %v88
    %v93 = vrsqrt.pop %v71
    %v94 = vmul.f32 %v93, %v71
    %v95 = vmul.f32 %v94, %v93
    %v96 = vmul.f32 0.5, %v95
    %v97 = vsub.f32 1.5, %v96
    %v98 = vmul.f32 %v93, %v97
    %vm99 = vweird.f32 %v71
    %vm100 = vweird.f32 %v93
    %vm101 = vmor %vm99, %vm100
    %v102 = vsel %vm101, %v93, %v98
    %v103 = vrsqrt.pop %v72
    %v104 = vmul.f32 %v103, %v72
    %v105 = vmul.f32 %v104, %v103
    %v106 = vmul.f32 0.5, %v105
    %v107 = vsub.f32 1.5, %v106
    %v108 = vmul.f32 %v103, %v107
    %vm109 = vweird.f32 %v72
    %vm110 = vweird.f32 %v103
    %vm111 = vmor %vm109, %vm110
    %v112 = vsel %vm111, %v103, %v108
    %v113 = vmul.f32 %v45, %v82
    %v114 = vmul.f32 %v46, %v92
    %v115 = vmul.f32 %v47, %v102
    %v116 = vmul.f32 %v48, %v112
    %v118 = vperm.slane %v19, 0
    %v120 = vmul.f32 %v113, %v118
    %v121 = vmul.f32 %v114, %v118
    %v122 = vmul.f32 %v115, %v118
    %v123 = vmul.f32 %v116, %v118
    %v125 = vperm.slane %v20, 0
    %v127 = vadd.f32 %v120, %v125
    %v128 = vadd.f32 %v121, %v125
    %v129 = vadd.f32 %v122, %v125
    %v130 = vadd.f32 %v123, %v125
    %v131 = vmax.f32 %v127, 0.0
    %v132 = vmax.f32 %v128, 0.0
    %v133 = vmax.f32 %v129, 0.0
    %v134 = vmax.f32 %v130, 0.0
    %135 = vst.msk [vmem:[#allocation2] sm:$0xff] %vm21, %v131
    %136 = vst.msk [vmem:[#allocation2 + $0x8] sm:$0xff] %vm21, %v132
    %137 = vst.msk [vmem:[#allocation2 + $0x10] sm:$0xff] %vm21, %v133
    %138 = vst.msk [vmem:[#allocation2 + $0x18] sm:$0xff] %vm21, %v134
    // Predicated region
    $region14: #{deeper_gcn_forward.7} parent=1 // pred_check
      _
    $region15: #{deeper_gcn_forward.7} parent=1 // pred_check_branch
      %140 = sbr.rel (0) target = $region17
    $region16: #{deeper_gcn_forward.7} parent=1 // pred_region
      %142 = vsyncadd [#allocation3], 0
      %s143 = sshll.u32 [#allocation2], 4
      %s144 = int_to_ptr.vmem [resolvable:$true] %s143
      %s145 = sshll.u32 %s3, 4
      %s146 = int_to_ptr.hbm [resolvable:$true] %s145
      %151 = dma.vmem_to_hbm [thread:$0]  %s144, 512, %s146, [#allocation3], 128, 128, 8
    $region17: #{deeper_gcn_forward.7} parent=1 // pred_fallthru
      _
    // Predicated region
    $region18: #{deeper_gcn_forward.7} parent=1 // pred_check
      _
    $region19: #{deeper_gcn_forward.7} parent=1 // pred_check_branch
      %153 = sbr.rel (0) target = $region21
    $region20: #{deeper_gcn_forward.7} parent=1 // pred_region
      %155 = dma.done [#allocation3], 512
    $region21: #{deeper_gcn_forward.7} parent=1 // pred_fallthru
      _
    %156 = vsyncpa [#allocation3], 1

// kernel: deeper_gcn_forward.4
$region0: #{deeper_gcn_forward.4}
  #allocation0 [shape = 'u32[]', space=smem, size = 0x4, offset = 0x4, fixed_abs, tag = 'smem constant byte address 0x4 - core index']
  #allocation1 [shape = 'u32[72,128]{1,0:T(1,128)}', space=vmem, size = 0x9000, scoped, tag = 'internal scratch']
  #allocation2 [shape = 'f32[32,64]{1,0:T(8,128)}', space=vmem, size = 0x4000, scoped, tag = 'scratch operand']
  #allocation3 [shape = 'f32[1,32]{1,0:T(1,128)}', space=vmem, size = 0x200, scoped, tag = 'scratch operand']
  #allocation4 [shape = 'f32[1,1]{1,0:T(1,128)S(6)}', space=smem, size = 0x200, scoped, tag = 'scoped memory for deeper_gcn_forward.4']
  %s0 = inlined_call_operand.<no memory space> [shape: f32[1,1], index: 0, kind: input, shape index: {}]
  %s1 = inlined_call_operand.vmem [shape: f32[32,32], index: 1, kind: input, shape index: {}, may-alias: {1,2}]
  %s2 = inlined_call_operand.vmem [shape: f32[32,32], index: 2, kind: input, shape index: {}, may-alias: {1,2}]
  %s3 = inlined_call_operand.vmem [shape: bf16[32,32], index: 3, kind: input, shape index: {}]
  %s4 = inlined_call_operand.vmem [shape: f32[1,32], index: 4, kind: input, shape index: {}]
  %s5 = inlined_call_operand.vmem [shape: f32[1,32], index: 5, kind: input, shape index: {}]
  %s6 = inlined_call_operand.vmem [shape: f32[32,64], index: 6, kind: input, shape index: {}]
  %s7 = inlined_call_operand.vmem [shape: f32[1,64], index: 7, kind: input, shape index: {}]
  %s8 = inlined_call_operand.vmem [shape: f32[1,64], index: 8, kind: input, shape index: {}]
  %s9 = inlined_call_operand.vmem [shape: f32[1,64], index: 9, kind: input, shape index: {}]
  %s10 = inlined_call_operand.vmem [shape: f32[64,32], index: 10, kind: input, shape index: {}]
  %s11 = inlined_call_operand.vmem [shape: f32[1,32], index: 11, kind: input, shape index: {}]
  %s12 = inlined_call_operand.vmem [shape: f32[32,32], index: 12, kind: output, shape index: {}]
  %s13 = sld [smem:[#allocation0]]
  $region66: #{deeper_gcn_forward.4} parent=0
    _
  %s15 = ssub.s32 1, %s13
  %s16 = scalar_select 0, %s15, %s13
  %17 = sst [smem:[#allocation4]] %s0
  // Predicated region
  $region2: #{deeper_gcn_forward.4} parent=0 // pred_check
    _
  $region3: #{deeper_gcn_forward.4} parent=0 // pred_check_branch
    %19 = sbr.rel (0) target = $region5
  $region4: #{deeper_gcn_forward.4} parent=0 // pred_region
    _
  $region5: #{deeper_gcn_forward.4} parent=0 // pred_fallthru
    _
  // Predicated region
  $region6: #{deeper_gcn_forward.4} parent=0 // pred_check
    _
  $region7: #{deeper_gcn_forward.4} parent=0 // pred_check_branch
    %21 = sbr.rel (0) target = $region9
  $region8: #{deeper_gcn_forward.4} parent=0 // pred_region
    _
  $region9: #{deeper_gcn_forward.4} parent=0 // pred_fallthru
    _
  // Predicated region
  $region10: #{deeper_gcn_forward.4} parent=0 // pred_check
    _
  $region11: #{deeper_gcn_forward.4} parent=0 // pred_check_branch
    %23 = sbr.rel (0) target = $region13
  $region12: #{deeper_gcn_forward.4} parent=0 // pred_region
    _
  $region13: #{deeper_gcn_forward.4} parent=0 // pred_fallthru
    _
  // Predicated region
  $region14: #{deeper_gcn_forward.4} parent=0 // pred_check
    _
  $region15: #{deeper_gcn_forward.4} parent=0 // pred_check_branch
    %25 = sbr.rel (0) target = $region17
  $region16: #{deeper_gcn_forward.4} parent=0 // pred_region
    _
  $region17: #{deeper_gcn_forward.4} parent=0 // pred_fallthru
    _
  // Predicated region
  $region18: #{deeper_gcn_forward.4} parent=0 // pred_check
    _
  $region19: #{deeper_gcn_forward.4} parent=0 // pred_check_branch
    %27 = sbr.rel (0) target = $region21
  $region20: #{deeper_gcn_forward.4} parent=0 // pred_region
    _
  $region21: #{deeper_gcn_forward.4} parent=0 // pred_fallthru
    _
  // Predicated region
  $region22: #{deeper_gcn_forward.4} parent=0 // pred_check
    _
  $region23: #{deeper_gcn_forward.4} parent=0 // pred_check_branch
    %29 = sbr.rel (0) target = $region25
  $region24: #{deeper_gcn_forward.4} parent=0 // pred_region
    _
  $region25: #{deeper_gcn_forward.4} parent=0 // pred_fallthru
    _
  // Predicated region
  $region26: #{deeper_gcn_forward.4} parent=0 // pred_check
    _
  $region27: #{deeper_gcn_forward.4} parent=0 // pred_check_branch
    %31 = sbr.rel (0) target = $region29
  $region28: #{deeper_gcn_forward.4} parent=0 // pred_region
    _
  $region29: #{deeper_gcn_forward.4} parent=0 // pred_fallthru
    _
  // Predicated region
  $region30: #{deeper_gcn_forward.4} parent=0 // pred_check
    _
  $region31: #{deeper_gcn_forward.4} parent=0 // pred_check_branch
    %33 = sbr.rel (0) target = $region33
  $region32: #{deeper_gcn_forward.4} parent=0 // pred_region
    _
  $region33: #{deeper_gcn_forward.4} parent=0 // pred_fallthru
    _
  // Predicated region
  $region34: #{deeper_gcn_forward.4} parent=0 // pred_check
    _
  $region35: #{deeper_gcn_forward.4} parent=0 // pred_check_branch
    %35 = sbr.rel (0) target = $region37
  $region36: #{deeper_gcn_forward.4} parent=0 // pred_region
    _
  $region37: #{deeper_gcn_forward.4} parent=0 // pred_fallthru
    _
  // Predicated region
  $region38: #{deeper_gcn_forward.4} parent=0 // pred_check
    _
  $region39: #{deeper_gcn_forward.4} parent=0 // pred_check_branch
    %37 = sbr.rel (0) target = $region41
  $region40: #{deeper_gcn_forward.4} parent=0 // pred_region
    _
  $region41: #{deeper_gcn_forward.4} parent=0 // pred_fallthru
    _
  // Predicated region
  $region42: #{deeper_gcn_forward.4} parent=0 // pred_check
    _
  $region43: #{deeper_gcn_forward.4} parent=0 // pred_check_branch
    %39 = sbr.rel (0) target = $region45
  $region44: #{deeper_gcn_forward.4} parent=0 // pred_region
    _
  $region45: #{deeper_gcn_forward.4} parent=0 // pred_fallthru
    _
  // Predicated region
  $region46: #{deeper_gcn_forward.4} parent=0 // pred_check
    _
  $region47: #{deeper_gcn_forward.4} parent=0 // pred_check_branch
    %41 = sbr.rel (0) target = $region49
  $region48: #{deeper_gcn_forward.4} parent=0 // pred_region
    _
  $region49: #{deeper_gcn_forward.4} parent=0 // pred_fallthru
    _
  %p43 = scmp.eq.s32.totalorder 0, 0
  // Predicated region
  $region50: #{deeper_gcn_forward.4} parent=0 // pred_check
    %p44 = pneg %p43
  $region51: #{deeper_gcn_forward.4} parent=0 // pred_check_branch
    %46 = sbr.rel (%p44) target = $region53
  $region52: #{deeper_gcn_forward.4} parent=0 // pred_region
    %vm47 = vcmask 523264
    %48 = vst.msk [vmem:[#allocation2] sm:$0xff] %vm47, 0.0
    %49 = vst.msk [vmem:[#allocation2 + $0x8] sm:$0xff] %vm47, 0.0
    %50 = vst.msk [vmem:[#allocation2 + $0x10] sm:$0xff] %vm47, 0.0
    %51 = vst.msk [vmem:[#allocation2 + $0x18] sm:$0xff] %vm47, 0.0
    %vm52 = vcmask 253952
    %53 = vst.msk [vmem:[#allocation3] sm:$0x1] %vm52, -inf
  $region53: #{deeper_gcn_forward.4} parent=0 // pred_fallthru
    _
  %s54 = sld [smem:[#allocation4]]
  %v55 = vld [vmem:[%s1] sm:$0xff]
  %v56 = vld [vmem:[%s1 + $0x8] sm:$0xff]
  %v57 = vld [vmem:[%s1 + $0x10] sm:$0xff]
  %v58 = vld [vmem:[%s1 + $0x18] sm:$0xff]
  %v59 = vmax.f32 %v55, 0.0
  %v60 = vmax.f32 %v56, 0.0
  %v61 = vmax.f32 %v57, 0.0
  %v62 = vmax.f32 %v58, 0.0
  %v63 = vadd.f32 %v59, 1e-07
  %v64 = vadd.f32 %v60, 1e-07
  %v65 = vadd.f32 %v61, 1e-07
  %v66 = vadd.f32 %v62, 1e-07
  %v67 = vstv %s54
  %v68 = vmul.f32 %v67, %v63
  %v69 = vmul.f32 %v67, %v64
  %v70 = vmul.f32 %v67, %v65
  %v71 = vmul.f32 %v67, %v66
  %v72 = vld [vmem:[#allocation3] sm:$0x1]
  %vm73 = vcmask 261120
  %v74 = vsel %vm73, %v68, -inf
  %v75 = vsel %vm73, %v69, -inf
  %v76 = vsel %vm73, %v70, -inf
  %v77 = vsel %vm73, %v71, -inf
  %v78 = vmax.f32 %v74, %v75
  %v79 = vmax.f32 %v76, %v77
  %v80 = vmax.f32 %v78, %v79
  %v81 = vrot.slane %v80, 4
  %v82 = vmax.f32 %v80, %v81
  %v83 = vrot.slane %v82, 2
  %v84 = vmax.f32 %v82, %v83
  %v85 = vrot.slane %v84, 1
  %v86 = vmax.f32 %v84, %v85
  %v87 = vmax.f32 %v72, %v86
  %v88 = vsub.f32 %v72, %v87
  %v89 = vmul.f32 %v88, 1.442695
  %v90 = vpow.pop %v89
  %v92 = vperm.slane %v87, 0
  %v94 = vsub.f32 %v68, %v92
  %v95 = vsub.f32 %v69, %v92
  %v96 = vsub.f32 %v70, %v92
  %v97 = vsub.f32 %v71, %v92
  %v98 = vmul.f32 %v94, 1.442695
  %v99 = vpow.pop %v98
  %v100 = vmul.f32 %v95, 1.442695
  %v101 = vpow.pop %v100
  %v102 = vmul.f32 %v96, 1.442695
  %v103 = vpow.pop %v102
  %v104 = vmul.f32 %v97, 1.442695
  %v105 = vpow.pop %v104
  %v106 = vmul.f32 %v99, %v63
  %v107 = vmul.f32 %v101, %v64
  %v108 = vmul.f32 %v103, %v65
  %v109 = vmul.f32 %v105, %v66
  %114 = vrot.lane.b32.xlu0 %v99, 32
  %v115 = vpop.permute.xlu0 %114
  %116 = vrot.lane.b32.xlu0 %v101, 32
  %v117 = vpop.permute.xlu0 %116
  %118 = vrot.lane.b32.xlu0 %v103, 32
  %v119 = vpop.permute.xlu0 %118
  %120 = vrot.lane.b32.xlu0 %v105, 32
  %v121 = vpop.permute.xlu0 %120
  %v126 = vsel %vm73, %v106, %v115
  %v127 = vsel %vm73, %v107, %v117
  %v128 = vsel %vm73, %v108, %v119
  %v129 = vsel %vm73, %v109, %v121
  %v130 = vpack.c.bf16 %v127, %v126
  %v131 = vpack.c.bf16 %v129, %v128
  %v132 = vld [vmem:[%s3] sm:$0xf]
  %v133 = vld [vmem:[%s3 + $0x4] sm:$0xf]
  %v134 = vld [vmem:[%s3 + $0x8] sm:$0xf]
  %v135 = vld [vmem:[%s3 + $0xc] sm:$0xf]
  %v140 = vunpack.c.l.b16 %v132
  %v141 = vunpack.c.l.b16 %v133
  %v142 = vunpack.c.l.b16 %v134
  %v143 = vunpack.c.l.b16 %v135
  %v144 = vpack.c.b16 %v141, %v140
  %v145 = vpack.c.b16 %v143, %v142
  %v147 = vsel %vm73, %v144, 0
  %v150 = vsel %vm73, %v145, 0
  %152 = vmatpush.bf16.msra.mxu0 0
  %153 = vmatpush.bf16.msra.mxu0 0
  %154 = vmatpush.bf16.msra.mxu0 0
  %155 = vmatpush.bf16.msra.mxu0 0
  %156 = vmatpush.bf16.msra.mxu0 0
  %157 = vmatpush.bf16.msra.mxu0 0
  %158 = vmatpush.bf16.msra.mxu0 %v131
  %159 = vmatpush.bf16.msra.mxu0 %v130
  %160 = vmatmul.bf16.gmra.mxu0 %v147
  %v161 = vpop.f32.mrf.mxu0
  %v162 = vadd.f32 0.0, %v161
  %v163 = vpop.f32.mrf.mxu0
  %v164 = vadd.f32 0.0, %v163
  %165 = vmatmul.bf16.gmra.mxu0 %v150
  %v166 = vpop.f32.mrf.mxu0
  %v167 = vadd.f32 0.0, %v166
  %v168 = vpop.f32.mrf.mxu0
  %v169 = vadd.f32 0.0, %v168
  %170 = vdwg.mxu0
  %v171 = vld [vmem:[#allocation2] sm:$0xff]
  %v172 = vld [vmem:[#allocation2 + $0x8] sm:$0xff]
  %v173 = vld [vmem:[#allocation2 + $0x10] sm:$0xff]
  %v174 = vld [vmem:[#allocation2 + $0x18] sm:$0xff]
  %v176 = vperm.slane %v90, 0
  %177 = vrot.lane.b32.xlu0 %v176, 32
  %v178 = vpop.permute.xlu0 %177
  %v180 = vsel %vm73, %v90, %v178
  %v181 = vperm.slane %v180, 0
  %v182 = vmul.f32 %v171, %v181
  %v183 = vmul.f32 %v172, %v181
  %v184 = vmul.f32 %v173, %v181
  %v185 = vmul.f32 %v174, %v181
  %v186 = vadd.f32 %v182, %v162
  %v187 = vadd.f32 %v183, %v164
  %v188 = vadd.f32 %v184, %v167
  %v189 = vadd.f32 %v185, %v169
  %vm190 = vcmask 523264
  %191 = vst.msk [vmem:[#allocation2] sm:$0xff] %vm190, %v186
  %192 = vst.msk [vmem:[#allocation2 + $0x8] sm:$0xff] %vm190, %v187
  %193 = vst.msk [vmem:[#allocation2 + $0x10] sm:$0xff] %vm190, %v188
  %194 = vst.msk [vmem:[#allocation2 + $0x18] sm:$0xff] %vm190, %v189
  %vm195 = vcmask 253952
  %196 = vst.msk [vmem:[#allocation3] sm:$0x1] %vm195, %v87
  // Predicated region
  $region54: #{deeper_gcn_forward.4} parent=0 // pred_check
    %p197 = pneg %p43
  $region55: #{deeper_gcn_forward.4} parent=0 // pred_check_branch
    %199 = sbr.rel (%p197) target = $region57
  $region56: #{deeper_gcn_forward.4} parent=0 // pred_region
    %v200 = vld [vmem:[%s2] sm:$0xff]
    %v201 = vld [vmem:[%s2 + $0x8] sm:$0xff]
    %v202 = vld [vmem:[%s2 + $0x10] sm:$0xff]
    %v203 = vld [vmem:[%s2 + $0x18] sm:$0xff]
    %v204 = vld [vmem:[#allocation2] sm:$0xff]
    %v205 = vld [vmem:[#allocation2 + $0x8] sm:$0xff]
    %v206 = vld [vmem:[#allocation2 + $0x10] sm:$0xff]
    %v207 = vld [vmem:[#allocation2 + $0x18] sm:$0xff]
    %vm208 = vcmp.gt.f32.partialorder %v204, 0.0
    %vm209 = vcmp.gt.f32.partialorder %v205, 0.0
    %vm210 = vcmp.gt.f32.partialorder %v206, 0.0
    %vm211 = vcmp.gt.f32.partialorder %v207, 0.0
    %v212 = vrcp.pop %v204
    %v213 = vrcp.pop %v205
    %v214 = vrcp.pop %v206
    %v215 = vrcp.pop %v207
    %v216 = vsel %vm208, %v212, 0.0
    %v217 = vsel %vm209, %v213, 0.0
    %v218 = vsel %vm210, %v214, 0.0
    %v219 = vsel %vm211, %v215, 0.0
    %224 = vrot.lane.b32.xlu0 %v216, 96
    %v225 = vpop.permute.xlu0 %224
    %226 = vrot.lane.b32.xlu0 %v217, 96
    %v227 = vpop.permute.xlu0 %226
    %228 = vrot.lane.b32.xlu0 %v218, 96
    %v229 = vpop.permute.xlu0 %228
    %230 = vrot.lane.b32.xlu0 %v219, 96
    %v231 = vpop.permute.xlu0 %230
    %v236 = vmul.f32 %v204, %v225
    %v237 = vmul.f32 %v205, %v227
    %v238 = vmul.f32 %v206, %v229
    %v239 = vmul.f32 %v207, %v231
    %v240 = vadd.f32 %v236, %v200
    %v241 = vadd.f32 %v237, %v201
    %v242 = vadd.f32 %v238, %v202
    %v243 = vadd.f32 %v239, %v203
    %v244 = vld [vmem:[%s6] sm:$0xff]
    %v245 = vld [vmem:[%s6 + $0x8] sm:$0xff]
    %v246 = vld [vmem:[%s6 + $0x10] sm:$0xff]
    %v247 = vld [vmem:[%s6 + $0x18] sm:$0xff]
    %v248 = vld [vmem:[%s7] sm:$0x1]
    %v250 = vperm.slane %v248, 0
    %v253 = vsel %vm73, %v240, 0
    %v256 = vsel %vm73, %v241, 0
    %v259 = vsel %vm73, %v242, 0
    %v262 = vsel %vm73, %v243, 0
    %264 = vmatpush.msra.mxu0 0.0
    %265 = vmatpush.msra.mxu0 0.0
    %266 = vmatpush.msra.mxu0 0.0
    %267 = vmatpush.msra.mxu0 0.0
    %268 = vmatpush.msra.mxu0 0.0
    %269 = vmatpush.msra.mxu0 0.0
    %270 = vmatpush.msra.mxu0 0.0
    %271 = vmatpush.msra.mxu0 0.0
    %272 = vmatpush.msra.mxu0 0.0
    %273 = vmatpush.msra.mxu0 0.0
    %274 = vmatpush.msra.mxu0 0.0
    %275 = vmatpush.msra.mxu0 0.0
    %276 = vmatpush.msra.mxu0 %v247
    %277 = vmatpush.msra.mxu0 %v246
    %278 = vmatpush.msra.mxu0 %v245
    %279 = vmatpush.msra.mxu0 %v244
    %280 = vmatmul.f32.gmra.mxu0 %v253
    %v281 = vpop.f32.mrf.mxu0
    %v282 = vadd.f32 %v250, %v281
    %283 = vmatmul.f32.gmra.mxu0 %v256
    %v284 = vpop.f32.mrf.mxu0
    %v285 = vadd.f32 %v250, %v284
    %286 = vmatmul.f32.gmra.mxu0 %v259
    %v287 = vpop.f32.mrf.mxu0
    %v288 = vadd.f32 %v250, %v287
    %289 = vmatmul.f32.gmra.mxu0 %v262
    %v290 = vpop.f32.mrf.mxu0
    %v291 = vadd.f32 %v250, %v290
    %292 = vdwg.mxu0
    %v293 = vld [vmem:[%s8] sm:$0x1]
    %v294 = vld [vmem:[%s9] sm:$0x1]
    %v295 = vsel %vm190, %v282, 0.0
    %296 = vadd.xlane.f32.xlu0 %v295
    %v297 = vpop.xlane.xlu0 %296
    %v298 = vsel %vm190, %v285, 0.0
    %299 = vadd.xlane.f32.xlu0 %v298
    %v300 = vpop.xlane.xlu0 %299
    %v301 = vsel %vm190, %v288, 0.0
    %302 = vadd.xlane.f32.xlu0 %v301
    %v303 = vpop.xlane.xlu0 %302
    %v304 = vsel %vm190, %v291, 0.0
    %305 = vadd.xlane.f32.xlu0 %v304
    %v306 = vpop.xlane.xlu0 %305
    %v307 = vrcp.pop 64.0
    %v308 = vmul.f32 64.0, %v307
    %v309 = vsub.f32 1.0, %v308
    %v310 = vmul.f32 %v307, %v309
    %v311 = vadd.f32 %v307, %v310
    %vm312 = vweird.f32 %v307
    %v313 = vsel %vm312, %v307, %v311
    %v314 = vmul.f32 %v297, %v313
    %v315 = vmul.f32 %v300, %v313
    %v316 = vmul.f32 %v303, %v313
    %v317 = vmul.f32 %v306, %v313
    %v318 = vsub.f32 %v282, %v314
    %v319 = vsub.f32 %v285, %v315
    %v320 = vsub.f32 %v288, %v316
    %v321 = vsub.f32 %v291, %v317
    %v322 = vmul.f32 %v318, %v318
    %v323 = vmul.f32 %v319, %v319
    %v324 = vmul.f32 %v320, %v320
    %v325 = vmul.f32 %v321, %v321
    %v326 = vsel %vm190, %v322, 0.0
    %327 = vadd.xlane.f32.xlu0 %v326
    %v328 = vpop.xlane.xlu0 %327
    %v329 = vsel %vm190, %v323, 0.0
    %330 = vadd.xlane.f32.xlu0 %v329
    %v331 = vpop.xlane.xlu0 %330
    %v332 = vsel %vm190, %v324, 0.0
    %333 = vadd.xlane.f32.xlu0 %v332
    %v334 = vpop.xlane.xlu0 %333
    %v335 = vsel %vm190, %v325, 0.0
    %336 = vadd.xlane.f32.xlu0 %v335
    %v337 = vpop.xlane.xlu0 %336
    %v338 = vmul.f32 %v328, %v313
    %v339 = vmul.f32 %v331, %v313
    %v340 = vmul.f32 %v334, %v313
    %v341 = vmul.f32 %v337, %v313
    %v342 = vadd.f32 %v338, 1e-05
    %v343 = vadd.f32 %v339, 1e-05
    %v344 = vadd.f32 %v340, 1e-05
    %v345 = vadd.f32 %v341, 1e-05
    %v346 = vrsqrt.pop %v342
    %v347 = vmul.f32 %v346, %v342
    %v348 = vmul.f32 %v347, %v346
    %v349 = vmul.f32 0.5, %v348
    %v350 = vsub.f32 1.5, %v349
    %v351 = vmul.f32 %v346, %v350
    %vm352 = vweird.f32 %v342
    %vm353 = vweird.f32 %v346
    %vm354 = vmor %vm352, %vm353
    %v355 = vsel %vm354, %v346, %v351
    %v356 = vrsqrt.pop %v343
    %v357 = vmul.f32 %v356, %v343
    %v358 = vmul.f32 %v357, %v356
    %v359 = vmul.f32 0.5, %v358
    %v360 = vsub.f32 1.5, %v359
    %v361 = vmul.f32 %v356, %v360
    %vm362 = vweird.f32 %v343
    %vm363 = vweird.f32 %v356
    %vm364 = vmor %vm362, %vm363
    %v365 = vsel %vm364, %v356, %v361
    %v366 = vrsqrt.pop %v344
    %v367 = vmul.f32 %v366, %v344
    %v368 = vmul.f32 %v367, %v366
    %v369 = vmul.f32 0.5, %v368
    %v370 = vsub.f32 1.5, %v369
    %v371 = vmul.f32 %v366, %v370
    %vm372 = vweird.f32 %v344
    %vm373 = vweird.f32 %v366
    %vm374 = vmor %vm372, %vm373
    %v375 = vsel %vm374, %v366, %v371
    %v376 = vrsqrt.pop %v345
    %v377 = vmul.f32 %v376, %v345
    %v378 = vmul.f32 %v377, %v376
    %v379 = vmul.f32 0.5, %v378
    %v380 = vsub.f32 1.5, %v379
    %v381 = vmul.f32 %v376, %v380
    %vm382 = vweird.f32 %v345
    %vm383 = vweird.f32 %v376
    %vm384 = vmor %vm382, %vm383
    %v385 = vsel %vm384, %v376, %v381
    %v386 = vmul.f32 %v318, %v355
    %v387 = vmul.f32 %v319, %v365
    %v388 = vmul.f32 %v320, %v375
    %v389 = vmul.f32 %v321, %v385
    %v391 = vperm.slane %v293, 0
    %v393 = vmul.f32 %v386, %v391
    %v394 = vmul.f32 %v387, %v391
    %v395 = vmul.f32 %v388, %v391
    %v396 = vmul.f32 %v389, %v391
    %v398 = vperm.slane %v294, 0
    %v400 = vadd.f32 %v393, %v398
    %v401 = vadd.f32 %v394, %v398
    %v402 = vadd.f32 %v395, %v398
    %v403 = vadd.f32 %v396, %v398
    %v404 = vmax.f32 %v400, 0.0
    %v405 = vmax.f32 %v401, 0.0
    %v406 = vmax.f32 %v402, 0.0
    %v407 = vmax.f32 %v403, 0.0
    %v408 = vld [vmem:[%s10] sm:$0xff]
    %v409 = vld [vmem:[%s10 + $0x8] sm:$0xff]
    %v410 = vld [vmem:[%s10 + $0x10] sm:$0xff]
    %v411 = vld [vmem:[%s10 + $0x18] sm:$0xff]
    %v412 = vld [vmem:[%s10 + $0x20] sm:$0xff]
    %v413 = vld [vmem:[%s10 + $0x28] sm:$0xff]
    %v414 = vld [vmem:[%s10 + $0x30] sm:$0xff]
    %v415 = vld [vmem:[%s10 + $0x38] sm:$0xff]
    %v416 = vld [vmem:[%s11] sm:$0x1]
    %v418 = vperm.slane %v416, 0
    %v421 = vsel %vm190, %v404, 0
    %v424 = vsel %vm190, %v405, 0
    %v427 = vsel %vm190, %v406, 0
    %v430 = vsel %vm190, %v407, 0
    %432 = vmatpush.msra.mxu0 0.0
    %433 = vmatpush.msra.mxu0 0.0
    %434 = vmatpush.msra.mxu0 0.0
    %435 = vmatpush.msra.mxu0 0.0
    %436 = vmatpush.msra.mxu0 0.0
    %437 = vmatpush.msra.mxu0 0.0
    %438 = vmatpush.msra.mxu0 0.0
    %439 = vmatpush.msra.mxu0 0.0
    %440 = vmatpush.msra.mxu0 %v415
    %441 = vmatpush.msra.mxu0 %v414
    %442 = vmatpush.msra.mxu0 %v413
    %443 = vmatpush.msra.mxu0 %v412
    %444 = vmatpush.msra.mxu0 %v411
    %445 = vmatpush.msra.mxu0 %v410
    %446 = vmatpush.msra.mxu0 %v409
    %447 = vmatpush.msra.mxu0 %v408
    %448 = vmatmul.f32.gmra.mxu0 %v421
    %v449 = vpop.f32.mrf.mxu0
    %v450 = vadd.f32 %v418, %v449
    %451 = vmatmul.f32.gmra.mxu0 %v424
    %v452 = vpop.f32.mrf.mxu0
    %v453 = vadd.f32 %v418, %v452
    %454 = vmatmul.f32.gmra.mxu0 %v427
    %v455 = vpop.f32.mrf.mxu0
    %v456 = vadd.f32 %v418, %v455
    %457 = vmatmul.f32.gmra.mxu0 %v430
    %v458 = vpop.f32.mrf.mxu0
    %v459 = vadd.f32 %v418, %v458
    %460 = vdwg.mxu0
    %461 = vst.msk [vmem:[%s12] sm:$0xff] %vm73, %v450
    %462 = vst.msk [vmem:[%s12 + $0x8] sm:$0xff] %vm73, %v453
    %463 = vst.msk [vmem:[%s12 + $0x10] sm:$0xff] %vm73, %v456
    %464 = vst.msk [vmem:[%s12 + $0x18] sm:$0xff] %vm73, %v459
  $region57: #{deeper_gcn_forward.4} parent=0 // pred_fallthru
    _
  // Predicated region
  $region58: #{deeper_gcn_forward.4} parent=0 // pred_check
    _
  $region59: #{deeper_gcn_forward.4} parent=0 // pred_check_branch
    %466 = sbr.rel (0) target = $region61
  $region60: #{deeper_gcn_forward.4} parent=0 // pred_region
    _
  $region61: #{deeper_gcn_forward.4} parent=0 // pred_fallthru
    _
  // Predicated region
  $region62: #{deeper_gcn_forward.4} parent=0 // pred_check
    _
  $region63: #{deeper_gcn_forward.4} parent=0 // pred_check_branch
    %468 = sbr.rel (0) target = $region65
  $region64: #{deeper_gcn_forward.4} parent=0 // pred_region
    _
  $region65: #{deeper_gcn_forward.4} parent=0 // pred_fallthru
    _

// kernel: deeper_gcn_forward.5
$region0: #{deeper_gcn_forward.5}
  #allocation0 [shape = 'u32[]', space=smem, size = 0x4, offset = 0x4, fixed_abs, tag = 'smem constant byte address 0x4 - core index']
  #allocation1 [shape = 'u32[72,128]{1,0:T(1,128)}', space=vmem, size = 0x9000, scoped, tag = 'internal scratch']
  #allocation2 [shape = 'f32[32,64]{1,0:T(8,128)}', space=vmem, size = 0x4000, scoped, tag = 'scratch operand']
  #allocation3 [shape = 'f32[1,32]{1,0:T(1,128)}', space=vmem, size = 0x200, scoped, tag = 'scratch operand']
  #allocation4 [shape = 'f32[1,1]{1,0:T(1,128)S(6)}', space=smem, size = 0x200, scoped, tag = 'scoped memory for deeper_gcn_forward.5']
  %s0 = inlined_call_operand.<no memory space> [shape: f32[1,1], index: 0, kind: input, shape index: {}]
  %s1 = inlined_call_operand.vmem [shape: f32[32,32], index: 1, kind: input, shape index: {}, may-alias: {1,2}]
  %s2 = inlined_call_operand.vmem [shape: f32[32,32], index: 2, kind: input, shape index: {}, may-alias: {1,2}]
  %s3 = inlined_call_operand.vmem [shape: bf16[32,32], index: 3, kind: input, shape index: {}]
  %s4 = inlined_call_operand.vmem [shape: f32[1,32], index: 4, kind: input, shape index: {}]
  %s5 = inlined_call_operand.vmem [shape: f32[1,32], index: 5, kind: input, shape index: {}]
  %s6 = inlined_call_operand.vmem [shape: f32[32,64], index: 6, kind: input, shape index: {}]
  %s7 = inlined_call_operand.vmem [shape: f32[1,64], index: 7, kind: input, shape index: {}]
  %s8 = inlined_call_operand.vmem [shape: f32[1,64], index: 8, kind: input, shape index: {}]
  %s9 = inlined_call_operand.vmem [shape: f32[1,64], index: 9, kind: input, shape index: {}]
  %s10 = inlined_call_operand.vmem [shape: f32[64,32], index: 10, kind: input, shape index: {}]
  %s11 = inlined_call_operand.vmem [shape: f32[1,32], index: 11, kind: input, shape index: {}]
  %s12 = inlined_call_operand.vmem [shape: f32[32,32], index: 12, kind: output, shape index: {}]
  %s13 = sld [smem:[#allocation0]]
  $region66: #{deeper_gcn_forward.5} parent=0
    _
  %s15 = ssub.s32 1, %s13
  %s16 = scalar_select 0, %s15, %s13
  %17 = sst [smem:[#allocation4]] %s0
  // Predicated region
  $region2: #{deeper_gcn_forward.5} parent=0 // pred_check
    _
  $region3: #{deeper_gcn_forward.5} parent=0 // pred_check_branch
    %19 = sbr.rel (0) target = $region5
  $region4: #{deeper_gcn_forward.5} parent=0 // pred_region
    _
  $region5: #{deeper_gcn_forward.5} parent=0 // pred_fallthru
    _
  // Predicated region
  $region6: #{deeper_gcn_forward.5} parent=0 // pred_check
    _
  $region7: #{deeper_gcn_forward.5} parent=0 // pred_check_branch
    %21 = sbr.rel (0) target = $region9
  $region8: #{deeper_gcn_forward.5} parent=0 // pred_region
    _
  $region9: #{deeper_gcn_forward.5} parent=0 // pred_fallthru
    _
  // Predicated region
  $region10: #{deeper_gcn_forward.5} parent=0 // pred_check
    _
  $region11: #{deeper_gcn_forward.5} parent=0 // pred_check_branch
    %23 = sbr.rel (0) target = $region13
  $region12: #{deeper_gcn_forward.5} parent=0 // pred_region
    _
  $region13: #{deeper_gcn_forward.5} parent=0 // pred_fallthru
    _
  // Predicated region
  $region14: #{deeper_gcn_forward.5} parent=0 // pred_check
    _
  $region15: #{deeper_gcn_forward.5} parent=0 // pred_check_branch
    %25 = sbr.rel (0) target = $region17
  $region16: #{deeper_gcn_forward.5} parent=0 // pred_region
    _
  $region17: #{deeper_gcn_forward.5} parent=0 // pred_fallthru
    _
  // Predicated region
  $region18: #{deeper_gcn_forward.5} parent=0 // pred_check
    _
  $region19: #{deeper_gcn_forward.5} parent=0 // pred_check_branch
    %27 = sbr.rel (0) target = $region21
  $region20: #{deeper_gcn_forward.5} parent=0 // pred_region
    _
  $region21: #{deeper_gcn_forward.5} parent=0 // pred_fallthru
    _
  // Predicated region
  $region22: #{deeper_gcn_forward.5} parent=0 // pred_check
    _
  $region23: #{deeper_gcn_forward.5} parent=0 // pred_check_branch
    %29 = sbr.rel (0) target = $region25
  $region24: #{deeper_gcn_forward.5} parent=0 // pred_region
    _
  $region25: #{deeper_gcn_forward.5} parent=0 // pred_fallthru
    _
  // Predicated region
  $region26: #{deeper_gcn_forward.5} parent=0 // pred_check
    _
  $region27: #{deeper_gcn_forward.5} parent=0 // pred_check_branch
    %31 = sbr.rel (0) target = $region29
  $region28: #{deeper_gcn_forward.5} parent=0 // pred_region
    _
  $region29: #{deeper_gcn_forward.5} parent=0 // pred_fallthru
    _
  // Predicated region
  $region30: #{deeper_gcn_forward.5} parent=0 // pred_check
    _
  $region31: #{deeper_gcn_forward.5} parent=0 // pred_check_branch
    %33 = sbr.rel (0) target = $region33
  $region32: #{deeper_gcn_forward.5} parent=0 // pred_region
    _
  $region33: #{deeper_gcn_forward.5} parent=0 // pred_fallthru
    _
  // Predicated region
  $region34: #{deeper_gcn_forward.5} parent=0 // pred_check
    _
  $region35: #{deeper_gcn_forward.5} parent=0 // pred_check_branch
    %35 = sbr.rel (0) target = $region37
  $region36: #{deeper_gcn_forward.5} parent=0 // pred_region
    _
  $region37: #{deeper_gcn_forward.5} parent=0 // pred_fallthru
    _
  // Predicated region
  $region38: #{deeper_gcn_forward.5} parent=0 // pred_check
    _
  $region39: #{deeper_gcn_forward.5} parent=0 // pred_check_branch
    %37 = sbr.rel (0) target = $region41
  $region40: #{deeper_gcn_forward.5} parent=0 // pred_region
    _
  $region41: #{deeper_gcn_forward.5} parent=0 // pred_fallthru
    _
  // Predicated region
  $region42: #{deeper_gcn_forward.5} parent=0 // pred_check
    _
  $region43: #{deeper_gcn_forward.5} parent=0 // pred_check_branch
    %39 = sbr.rel (0) target = $region45
  $region44: #{deeper_gcn_forward.5} parent=0 // pred_region
    _
  $region45: #{deeper_gcn_forward.5} parent=0 // pred_fallthru
    _
  // Predicated region
  $region46: #{deeper_gcn_forward.5} parent=0 // pred_check
    _
  $region47: #{deeper_gcn_forward.5} parent=0 // pred_check_branch
    %41 = sbr.rel (0) target = $region49
  $region48: #{deeper_gcn_forward.5} parent=0 // pred_region
    _
  $region49: #{deeper_gcn_forward.5} parent=0 // pred_fallthru
    _
  %p43 = scmp.eq.s32.totalorder 0, 0
  // Predicated region
  $region50: #{deeper_gcn_forward.5} parent=0 // pred_check
    %p44 = pneg %p43
  $region51: #{deeper_gcn_forward.5} parent=0 // pred_check_branch
    %46 = sbr.rel (%p44) target = $region53
  $region52: #{deeper_gcn_forward.5} parent=0 // pred_region
    %vm47 = vcmask 523264
    %48 = vst.msk [vmem:[#allocation2] sm:$0xff] %vm47, 0.0
    %49 = vst.msk [vmem:[#allocation2 + $0x8] sm:$0xff] %vm47, 0.0
    %50 = vst.msk [vmem:[#allocation2 + $0x10] sm:$0xff] %vm47, 0.0
    %51 = vst.msk [vmem:[#allocation2 + $0x18] sm:$0xff] %vm47, 0.0
    %vm52 = vcmask 253952
    %53 = vst.msk [vmem:[#allocation3] sm:$0x1] %vm52, -inf
  $region53: #{deeper_gcn_forward.5} parent=0 // pred_fallthru
    _
  %s54 = sld [smem:[#allocation4]]
  %v55 = vld [vmem:[%s1] sm:$0xff]
  %v56 = vld [vmem:[%s1 + $0x8] sm:$0xff]
  %v57 = vld [vmem:[%s1 + $0x10] sm:$0xff]
  %v58 = vld [vmem:[%s1 + $0x18] sm:$0xff]
  %v59 = vld [vmem:[%s4] sm:$0x1]
  %v60 = vld [vmem:[%s5] sm:$0x1]
  %vm61 = vcmask 261120
  %v62 = vsel %vm61, %v55, 0.0
  %63 = vadd.xlane.f32.xlu0 %v62
  %v64 = vpop.xlane.xlu0 %63
  %v65 = vsel %vm61, %v56, 0.0
  %66 = vadd.xlane.f32.xlu0 %v65
  %v67 = vpop.xlane.xlu0 %66
  %v68 = vsel %vm61, %v57, 0.0
  %69 = vadd.xlane.f32.xlu0 %v68
  %v70 = vpop.xlane.xlu0 %69
  %v71 = vsel %vm61, %v58, 0.0
  %72 = vadd.xlane.f32.xlu0 %v71
  %v73 = vpop.xlane.xlu0 %72
  %v74 = vrcp.pop 32.0
  %v75 = vmul.f32 32.0, %v74
  %v76 = vsub.f32 1.0, %v75
  %v77 = vmul.f32 %v74, %v76
  %v78 = vadd.f32 %v74, %v77
  %vm79 = vweird.f32 %v74
  %v80 = vsel %vm79, %v74, %v78
  %v81 = vmul.f32 %v64, %v80
  %v82 = vmul.f32 %v67, %v80
  %v83 = vmul.f32 %v70, %v80
  %v84 = vmul.f32 %v73, %v80
  %v85 = vsub.f32 %v55, %v81
  %v86 = vsub.f32 %v56, %v82
  %v87 = vsub.f32 %v57, %v83
  %v88 = vsub.f32 %v58, %v84
  %v89 = vmul.f32 %v85, %v85
  %v90 = vmul.f32 %v86, %v86
  %v91 = vmul.f32 %v87, %v87
  %v92 = vmul.f32 %v88, %v88
  %v93 = vsel %vm61, %v89, 0.0
  %94 = vadd.xlane.f32.xlu0 %v93
  %v95 = vpop.xlane.xlu0 %94
  %v96 = vsel %vm61, %v90, 0.0
  %97 = vadd.xlane.f32.xlu0 %v96
  %v98 = vpop.xlane.xlu0 %97
  %v99 = vsel %vm61, %v91, 0.0
  %100 = vadd.xlane.f32.xlu0 %v99
  %v101 = vpop.xlane.xlu0 %100
  %v102 = vsel %vm61, %v92, 0.0
  %103 = vadd.xlane.f32.xlu0 %v102
  %v104 = vpop.xlane.xlu0 %103
  %v105 = vmul.f32 %v95, %v80
  %v106 = vmul.f32 %v98, %v80
  %v107 = vmul.f32 %v101, %v80
  %v108 = vmul.f32 %v104, %v80
  %v109 = vadd.f32 %v105, 1e-05
  %v110 = vadd.f32 %v106, 1e-05
  %v111 = vadd.f32 %v107, 1e-05
  %v112 = vadd.f32 %v108, 1e-05
  %v113 = vrsqrt.pop %v109
  %v114 = vmul.f32 %v113, %v109
  %v115 = vmul.f32 %v114, %v113
  %v116 = vmul.f32 0.5, %v115
  %v117 = vsub.f32 1.5, %v116
  %v118 = vmul.f32 %v113, %v117
  %vm119 = vweird.f32 %v109
  %vm120 = vweird.f32 %v113
  %vm121 = vmor %vm119, %vm120
  %v122 = vsel %vm121, %v113, %v118
  %v123 = vrsqrt.pop %v110
  %v124 = vmul.f32 %v123, %v110
  %v125 = vmul.f32 %v124, %v123
  %v126 = vmul.f32 0.5, %v125
  %v127 = vsub.f32 1.5, %v126
  %v128 = vmul.f32 %v123, %v127
  %vm129 = vweird.f32 %v110
  %vm130 = vweird.f32 %v123
  %vm131 = vmor %vm129, %vm130
  %v132 = vsel %vm131, %v123, %v128
  %v133 = vrsqrt.pop %v111
  %v134 = vmul.f32 %v133, %v111
  %v135 = vmul.f32 %v134, %v133
  %v136 = vmul.f32 0.5, %v135
  %v137 = vsub.f32 1.5, %v136
  %v138 = vmul.f32 %v133, %v137
  %vm139 = vweird.f32 %v111
  %vm140 = vweird.f32 %v133
  %vm141 = vmor %vm139, %vm140
  %v142 = vsel %vm141, %v133, %v138
  %v143 = vrsqrt.pop %v112
  %v144 = vmul.f32 %v143, %v112
  %v145 = vmul.f32 %v144, %v143
  %v146 = vmul.f32 0.5, %v145
  %v147 = vsub.f32 1.5, %v146
  %v148 = vmul.f32 %v143, %v147
  %vm149 = vweird.f32 %v112
  %vm150 = vweird.f32 %v143
  %vm151 = vmor %vm149, %vm150
  %v152 = vsel %vm151, %v143, %v148
  %v153 = vmul.f32 %v85, %v122
  %v154 = vmul.f32 %v86, %v132
  %v155 = vmul.f32 %v87, %v142
  %v156 = vmul.f32 %v88, %v152
  %v158 = vperm.slane %v59, 0
  %v160 = vmul.f32 %v153, %v158
  %v161 = vmul.f32 %v154, %v158
  %v162 = vmul.f32 %v155, %v158
  %v163 = vmul.f32 %v156, %v158
  %v165 = vperm.slane %v60, 0
  %v167 = vadd.f32 %v160, %v165
  %v168 = vadd.f32 %v161, %v165
  %v169 = vadd.f32 %v162, %v165
  %v170 = vadd.f32 %v163, %v165
  %v171 = vmax.f32 %v167, 0.0
  %v172 = vmax.f32 %v168, 0.0
  %v173 = vmax.f32 %v169, 0.0
  %v174 = vmax.f32 %v170, 0.0
  %v175 = vmax.f32 %v171, 0.0
  %v176 = vmax.f32 %v172, 0.0
  %v177 = vmax.f32 %v173, 0.0
  %v178 = vmax.f32 %v174, 0.0
  %v179 = vadd.f32 %v175, 1e-07
  %v180 = vadd.f32 %v176, 1e-07
  %v181 = vadd.f32 %v177, 1e-07
  %v182 = vadd.f32 %v178, 1e-07
  %v183 = vstv %s54
  %v184 = vmul.f32 %v183, %v179
  %v185 = vmul.f32 %v183, %v180
  %v186 = vmul.f32 %v183, %v181
  %v187 = vmul.f32 %v183, %v182
  %v188 = vld [vmem:[#allocation3] sm:$0x1]
  %v189 = vsel %vm61, %v184, -inf
  %v190 = vsel %vm61, %v185, -inf
  %v191 = vsel %vm61, %v186, -inf
  %v192 = vsel %vm61, %v187, -inf
  %v193 = vmax.f32 %v189, %v190
  %v194 = vmax.f32 %v191, %v192
  %v195 = vmax.f32 %v193, %v194
  %v196 = vrot.slane %v195, 4
  %v197 = vmax.f32 %v195, %v196
  %v198 = vrot.slane %v197, 2
  %v199 = vmax.f32 %v197, %v198
  %v200 = vrot.slane %v199, 1
  %v201 = vmax.f32 %v199, %v200
  %v202 = vmax.f32 %v188, %v201
  %v203 = vsub.f32 %v188, %v202
  %v204 = vmul.f32 %v203, 1.442695
  %v205 = vpow.pop %v204
  %v207 = vperm.slane %v202, 0
  %v209 = vsub.f32 %v184, %v207
  %v210 = vsub.f32 %v185, %v207
  %v211 = vsub.f32 %v186, %v207
  %v212 = vsub.f32 %v187, %v207
  %v213 = vmul.f32 %v209, 1.442695
  %v214 = vpow.pop %v213
  %v215 = vmul.f32 %v210, 1.442695
  %v216 = vpow.pop %v215
  %v217 = vmul.f32 %v211, 1.442695
  %v218 = vpow.pop %v217
  %v219 = vmul.f32 %v212, 1.442695
  %v220 = vpow.pop %v219
  %v221 = vmul.f32 %v214, %v179
  %v222 = vmul.f32 %v216, %v180
  %v223 = vmul.f32 %v218, %v181
  %v224 = vmul.f32 %v220, %v182
  %229 = vrot.lane.b32.xlu0 %v214, 32
  %v230 = vpop.permute.xlu0 %229
  %231 = vrot.lane.b32.xlu0 %v216, 32
  %v232 = vpop.permute.xlu0 %231
  %233 = vrot.lane.b32.xlu0 %v218, 32
  %v234 = vpop.permute.xlu0 %233
  %235 = vrot.lane.b32.xlu0 %v220, 32
  %v236 = vpop.permute.xlu0 %235
  %v241 = vsel %vm61, %v221, %v230
  %v242 = vsel %vm61, %v222, %v232
  %v243 = vsel %vm61, %v223, %v234
  %v244 = vsel %vm61, %v224, %v236
  %v245 = vpack.c.bf16 %v242, %v241
  %v246 = vpack.c.bf16 %v244, %v243
  %v247 = vld [vmem:[%s3] sm:$0xf]
  %v248 = vld [vmem:[%s3 + $0x4] sm:$0xf]
  %v249 = vld [vmem:[%s3 + $0x8] sm:$0xf]
  %v250 = vld [vmem:[%s3 + $0xc] sm:$0xf]
  %v255 = vunpack.c.l.b16 %v247
  %v256 = vunpack.c.l.b16 %v248
  %v257 = vunpack.c.l.b16 %v249
  %v258 = vunpack.c.l.b16 %v250
  %v259 = vpack.c.b16 %v256, %v255
  %v260 = vpack.c.b16 %v258, %v257
  %v262 = vsel %vm61, %v259, 0
  %v265 = vsel %vm61, %v260, 0
  %267 = vmatpush.bf16.msra.mxu0 0
  %268 = vmatpush.bf16.msra.mxu0 0
  %269 = vmatpush.bf16.msra.mxu0 0
  %270 = vmatpush.bf16.msra.mxu0 0
  %271 = vmatpush.bf16.msra.mxu0 0
  %272 = vmatpush.bf16.msra.mxu0 0
  %273 = vmatpush.bf16.msra.mxu0 %v246
  %274 = vmatpush.bf16.msra.mxu0 %v245
  %275 = vmatmul.bf16.gmra.mxu0 %v262
  %v276 = vpop.f32.mrf.mxu0
  %v277 = vadd.f32 0.0, %v276
  %v278 = vpop.f32.mrf.mxu0
  %v279 = vadd.f32 0.0, %v278
  %280 = vmatmul.bf16.gmra.mxu0 %v265
  %v281 = vpop.f32.mrf.mxu0
  %v282 = vadd.f32 0.0, %v281
  %v283 = vpop.f32.mrf.mxu0
  %v284 = vadd.f32 0.0, %v283
  %285 = vdwg.mxu0
  %v286 = vld [vmem:[#allocation2] sm:$0xff]
  %v287 = vld [vmem:[#allocation2 + $0x8] sm:$0xff]
  %v288 = vld [vmem:[#allocation2 + $0x10] sm:$0xff]
  %v289 = vld [vmem:[#allocation2 + $0x18] sm:$0xff]
  %v291 = vperm.slane %v205, 0
  %292 = vrot.lane.b32.xlu0 %v291, 32
  %v293 = vpop.permute.xlu0 %292
  %v295 = vsel %vm61, %v205, %v293
  %v296 = vperm.slane %v295, 0
  %v297 = vmul.f32 %v286, %v296
  %v298 = vmul.f32 %v287, %v296
  %v299 = vmul.f32 %v288, %v296
  %v300 = vmul.f32 %v289, %v296
  %v301 = vadd.f32 %v297, %v277
  %v302 = vadd.f32 %v298, %v279
  %v303 = vadd.f32 %v299, %v282
  %v304 = vadd.f32 %v300, %v284
  %vm305 = vcmask 523264
  %306 = vst.msk [vmem:[#allocation2] sm:$0xff] %vm305, %v301
  %307 = vst.msk [vmem:[#allocation2 + $0x8] sm:$0xff] %vm305, %v302
  %308 = vst.msk [vmem:[#allocation2 + $0x10] sm:$0xff] %vm305, %v303
  %309 = vst.msk [vmem:[#allocation2 + $0x18] sm:$0xff] %vm305, %v304
  %vm310 = vcmask 253952
  %311 = vst.msk [vmem:[#allocation3] sm:$0x1] %vm310, %v202
  // Predicated region
  $region54: #{deeper_gcn_forward.5} parent=0 // pred_check
    %p312 = pneg %p43
  $region55: #{deeper_gcn_forward.5} parent=0 // pred_check_branch
    %314 = sbr.rel (%p312) target = $region57
  $region56: #{deeper_gcn_forward.5} parent=0 // pred_region
    %v315 = vld [vmem:[%s2] sm:$0xff]
    %v316 = vld [vmem:[%s2 + $0x8] sm:$0xff]
    %v317 = vld [vmem:[%s2 + $0x10] sm:$0xff]
    %v318 = vld [vmem:[%s2 + $0x18] sm:$0xff]
    %v319 = vld [vmem:[%s4] sm:$0x1]
    %v320 = vld [vmem:[%s5] sm:$0x1]
    %v321 = vsel %vm61, %v315, 0.0
    %322 = vadd.xlane.f32.xlu0 %v321
    %v323 = vpop.xlane.xlu0 %322
    %v324 = vsel %vm61, %v316, 0.0
    %325 = vadd.xlane.f32.xlu0 %v324
    %v326 = vpop.xlane.xlu0 %325
    %v327 = vsel %vm61, %v317, 0.0
    %328 = vadd.xlane.f32.xlu0 %v327
    %v329 = vpop.xlane.xlu0 %328
    %v330 = vsel %vm61, %v318, 0.0
    %331 = vadd.xlane.f32.xlu0 %v330
    %v332 = vpop.xlane.xlu0 %331
    %v333 = vmul.f32 %v323, %v80
    %v334 = vmul.f32 %v326, %v80
    %v335 = vmul.f32 %v329, %v80
    %v336 = vmul.f32 %v332, %v80
    %v337 = vsub.f32 %v315, %v333
    %v338 = vsub.f32 %v316, %v334
    %v339 = vsub.f32 %v317, %v335
    %v340 = vsub.f32 %v318, %v336
    %v341 = vmul.f32 %v337, %v337
    %v342 = vmul.f32 %v338, %v338
    %v343 = vmul.f32 %v339, %v339
    %v344 = vmul.f32 %v340, %v340
    %v345 = vsel %vm61, %v341, 0.0
    %346 = vadd.xlane.f32.xlu0 %v345
    %v347 = vpop.xlane.xlu0 %346
    %v348 = vsel %vm61, %v342, 0.0
    %349 = vadd.xlane.f32.xlu0 %v348
    %v350 = vpop.xlane.xlu0 %349
    %v351 = vsel %vm61, %v343, 0.0
    %352 = vadd.xlane.f32.xlu0 %v351
    %v353 = vpop.xlane.xlu0 %352
    %v354 = vsel %vm61, %v344, 0.0
    %355 = vadd.xlane.f32.xlu0 %v354
    %v356 = vpop.xlane.xlu0 %355
    %v357 = vmul.f32 %v347, %v80
    %v358 = vmul.f32 %v350, %v80
    %v359 = vmul.f32 %v353, %v80
    %v360 = vmul.f32 %v356, %v80
    %v361 = vadd.f32 %v357, 1e-05
    %v362 = vadd.f32 %v358, 1e-05
    %v363 = vadd.f32 %v359, 1e-05
    %v364 = vadd.f32 %v360, 1e-05
    %v365 = vrsqrt.pop %v361
    %v366 = vmul.f32 %v365, %v361
    %v367 = vmul.f32 %v366, %v365
    %v368 = vmul.f32 0.5, %v367
    %v369 = vsub.f32 1.5, %v368
    %v370 = vmul.f32 %v365, %v369
    %vm371 = vweird.f32 %v361
    %vm372 = vweird.f32 %v365
    %vm373 = vmor %vm371, %vm372
    %v374 = vsel %vm373, %v365, %v370
    %v375 = vrsqrt.pop %v362
    %v376 = vmul.f32 %v375, %v362
    %v377 = vmul.f32 %v376, %v375
    %v378 = vmul.f32 0.5, %v377
    %v379 = vsub.f32 1.5, %v378
    %v380 = vmul.f32 %v375, %v379
    %vm381 = vweird.f32 %v362
    %vm382 = vweird.f32 %v375
    %vm383 = vmor %vm381, %vm382
    %v384 = vsel %vm383, %v375, %v380
    %v385 = vrsqrt.pop %v363
    %v386 = vmul.f32 %v385, %v363
    %v387 = vmul.f32 %v386, %v385
    %v388 = vmul.f32 0.5, %v387
    %v389 = vsub.f32 1.5, %v388
    %v390 = vmul.f32 %v385, %v389
    %vm391 = vweird.f32 %v363
    %vm392 = vweird.f32 %v385
    %vm393 = vmor %vm391, %vm392
    %v394 = vsel %vm393, %v385, %v390
    %v395 = vrsqrt.pop %v364
    %v396 = vmul.f32 %v395, %v364
    %v397 = vmul.f32 %v396, %v395
    %v398 = vmul.f32 0.5, %v397
    %v399 = vsub.f32 1.5, %v398
    %v400 = vmul.f32 %v395, %v399
    %vm401 = vweird.f32 %v364
    %vm402 = vweird.f32 %v395
    %vm403 = vmor %vm401, %vm402
    %v404 = vsel %vm403, %v395, %v400
    %v405 = vmul.f32 %v337, %v374
    %v406 = vmul.f32 %v338, %v384
    %v407 = vmul.f32 %v339, %v394
    %v408 = vmul.f32 %v340, %v404
    %v410 = vperm.slane %v319, 0
    %v412 = vmul.f32 %v405, %v410
    %v413 = vmul.f32 %v406, %v410
    %v414 = vmul.f32 %v407, %v410
    %v415 = vmul.f32 %v408, %v410
    %v417 = vperm.slane %v320, 0
    %v419 = vadd.f32 %v412, %v417
    %v420 = vadd.f32 %v413, %v417
    %v421 = vadd.f32 %v414, %v417
    %v422 = vadd.f32 %v415, %v417
    %v423 = vmax.f32 %v419, 0.0
    %v424 = vmax.f32 %v420, 0.0
    %v425 = vmax.f32 %v421, 0.0
    %v426 = vmax.f32 %v422, 0.0
    %v427 = vld [vmem:[#allocation2] sm:$0xff]
    %v428 = vld [vmem:[#allocation2 + $0x8] sm:$0xff]
    %v429 = vld [vmem:[#allocation2 + $0x10] sm:$0xff]
    %v430 = vld [vmem:[#allocation2 + $0x18] sm:$0xff]
    %vm431 = vcmp.gt.f32.partialorder %v427, 0.0
    %vm432 = vcmp.gt.f32.partialorder %v428, 0.0
    %vm433 = vcmp.gt.f32.partialorder %v429, 0.0
    %vm434 = vcmp.gt.f32.partialorder %v430, 0.0
    %v435 = vrcp.pop %v427
    %v436 = vrcp.pop %v428
    %v437 = vrcp.pop %v429
    %v438 = vrcp.pop %v430
    %v439 = vsel %vm431, %v435, 0.0
    %v440 = vsel %vm432, %v436, 0.0
    %v441 = vsel %vm433, %v437, 0.0
    %v442 = vsel %vm434, %v438, 0.0
    %447 = vrot.lane.b32.xlu0 %v439, 96
    %v448 = vpop.permute.xlu0 %447
    %449 = vrot.lane.b32.xlu0 %v440, 96
    %v450 = vpop.permute.xlu0 %449
    %451 = vrot.lane.b32.xlu0 %v441, 96
    %v452 = vpop.permute.xlu0 %451
    %453 = vrot.lane.b32.xlu0 %v442, 96
    %v454 = vpop.permute.xlu0 %453
    %v459 = vmul.f32 %v427, %v448
    %v460 = vmul.f32 %v428, %v450
    %v461 = vmul.f32 %v429, %v452
    %v462 = vmul.f32 %v430, %v454
    %v463 = vadd.f32 %v459, %v423
    %v464 = vadd.f32 %v460, %v424
    %v465 = vadd.f32 %v461, %v425
    %v466 = vadd.f32 %v462, %v426
    %v467 = vld [vmem:[%s6] sm:$0xff]
    %v468 = vld [vmem:[%s6 + $0x8] sm:$0xff]
    %v469 = vld [vmem:[%s6 + $0x10] sm:$0xff]
    %v470 = vld [vmem:[%s6 + $0x18] sm:$0xff]
    %v471 = vld [vmem:[%s7] sm:$0x1]
    %v473 = vperm.slane %v471, 0
    %v476 = vsel %vm61, %v463, 0
    %v479 = vsel %vm61, %v464, 0
    %v482 = vsel %vm61, %v465, 0
    %v485 = vsel %vm61, %v466, 0
    %487 = vmatpush.msra.mxu0 0.0
    %488 = vmatpush.msra.mxu0 0.0
    %489 = vmatpush.msra.mxu0 0.0
    %490 = vmatpush.msra.mxu0 0.0
    %491 = vmatpush.msra.mxu0 0.0
    %492 = vmatpush.msra.mxu0 0.0
    %493 = vmatpush.msra.mxu0 0.0
    %494 = vmatpush.msra.mxu0 0.0
    %495 = vmatpush.msra.mxu0 0.0
    %496 = vmatpush.msra.mxu0 0.0
    %497 = vmatpush.msra.mxu0 0.0
    %498 = vmatpush.msra.mxu0 0.0
    %499 = vmatpush.msra.mxu0 %v470
    %500 = vmatpush.msra.mxu0 %v469
    %501 = vmatpush.msra.mxu0 %v468
    %502 = vmatpush.msra.mxu0 %v467
    %503 = vmatmul.f32.gmra.mxu0 %v476
    %v504 = vpop.f32.mrf.mxu0
    %v505 = vadd.f32 %v473, %v504
    %506 = vmatmul.f32.gmra.mxu0 %v479
    %v507 = vpop.f32.mrf.mxu0
    %v508 = vadd.f32 %v473, %v507
    %509 = vmatmul.f32.gmra.mxu0 %v482
    %v510 = vpop.f32.mrf.mxu0
    %v511 = vadd.f32 %v473, %v510
    %512 = vmatmul.f32.gmra.mxu0 %v485
    %v513 = vpop.f32.mrf.mxu0
    %v514 = vadd.f32 %v473, %v513
    %515 = vdwg.mxu0
    %v516 = vld [vmem:[%s8] sm:$0x1]
    %v517 = vld [vmem:[%s9] sm:$0x1]
    %v518 = vsel %vm305, %v505, 0.0
    %519 = vadd.xlane.f32.xlu0 %v518
    %v520 = vpop.xlane.xlu0 %519
    %v521 = vsel %vm305, %v508, 0.0
    %522 = vadd.xlane.f32.xlu0 %v521
    %v523 = vpop.xlane.xlu0 %522
    %v524 = vsel %vm305, %v511, 0.0
    %525 = vadd.xlane.f32.xlu0 %v524
    %v526 = vpop.xlane.xlu0 %525
    %v527 = vsel %vm305, %v514, 0.0
    %528 = vadd.xlane.f32.xlu0 %v527
    %v529 = vpop.xlane.xlu0 %528
    %v530 = vrcp.pop 64.0
    %v531 = vmul.f32 64.0, %v530
    %v532 = vsub.f32 1.0, %v531
    %v533 = vmul.f32 %v530, %v532
    %v534 = vadd.f32 %v530, %v533
    %vm535 = vweird.f32 %v530
    %v536 = vsel %vm535, %v530, %v534
    %v537 = vmul.f32 %v520, %v536
    %v538 = vmul.f32 %v523, %v536
    %v539 = vmul.f32 %v526, %v536
    %v540 = vmul.f32 %v529, %v536
    %v541 = vsub.f32 %v505, %v537
    %v542 = vsub.f32 %v508, %v538
    %v543 = vsub.f32 %v511, %v539
    %v544 = vsub.f32 %v514, %v540
    %v545 = vmul.f32 %v541, %v541
    %v546 = vmul.f32 %v542, %v542
    %v547 = vmul.f32 %v543, %v543
    %v548 = vmul.f32 %v544, %v544
    %v549 = vsel %vm305, %v545, 0.0
    %550 = vadd.xlane.f32.xlu0 %v549
    %v551 = vpop.xlane.xlu0 %550
    %v552 = vsel %vm305, %v546, 0.0
    %553 = vadd.xlane.f32.xlu0 %v552
    %v554 = vpop.xlane.xlu0 %553
    %v555 = vsel %vm305, %v547, 0.0
    %556 = vadd.xlane.f32.xlu0 %v555
    %v557 = vpop.xlane.xlu0 %556
    %v558 = vsel %vm305, %v548, 0.0
    %559 = vadd.xlane.f32.xlu0 %v558
    %v560 = vpop.xlane.xlu0 %559
    %v561 = vmul.f32 %v551, %v536
    %v562 = vmul.f32 %v554, %v536
    %v563 = vmul.f32 %v557, %v536
    %v564 = vmul.f32 %v560, %v536
    %v565 = vadd.f32 %v561, 1e-05
    %v566 = vadd.f32 %v562, 1e-05
    %v567 = vadd.f32 %v563, 1e-05
    %v568 = vadd.f32 %v564, 1e-05
    %v569 = vrsqrt.pop %v565
    %v570 = vmul.f32 %v569, %v565
    %v571 = vmul.f32 %v570, %v569
    %v572 = vmul.f32 0.5, %v571
    %v573 = vsub.f32 1.5, %v572
    %v574 = vmul.f32 %v569, %v573
    %vm575 = vweird.f32 %v565
    %vm576 = vweird.f32 %v569
    %vm577 = vmor %vm575, %vm576
    %v578 = vsel %vm577, %v569, %v574
    %v579 = vrsqrt.pop %v566
    %v580 = vmul.f32 %v579, %v566
    %v581 = vmul.f32 %v580, %v579
    %v582 = vmul.f32 0.5, %v581
    %v583 = vsub.f32 1.5, %v582
    %v584 = vmul.f32 %v579, %v583
    %vm585 = vweird.f32 %v566
    %vm586 = vweird.f32 %v579
    %vm587 = vmor %vm585, %vm586
    %v588 = vsel %vm587, %v579, %v584
    %v589 = vrsqrt.pop %v567
    %v590 = vmul.f32 %v589, %v567
    %v591 = vmul.f32 %v590, %v589
    %v592 = vmul.f32 0.5, %v591
    %v593 = vsub.f32 1.5, %v592
    %v594 = vmul.f32 %v589, %v593
    %vm595 = vweird.f32 %v567
    %vm596 = vweird.f32 %v589
    %vm597 = vmor %vm595, %vm596
    %v598 = vsel %vm597, %v589, %v594
    %v599 = vrsqrt.pop %v568
    %v600 = vmul.f32 %v599, %v568
    %v601 = vmul.f32 %v600, %v599
    %v602 = vmul.f32 0.5, %v601
    %v603 = vsub.f32 1.5, %v602
    %v604 = vmul.f32 %v599, %v603
    %vm605 = vweird.f32 %v568
    %vm606 = vweird.f32 %v599
    %vm607 = vmor %vm605, %vm606
    %v608 = vsel %vm607, %v599, %v604
    %v609 = vmul.f32 %v541, %v578
    %v610 = vmul.f32 %v542, %v588
    %v611 = vmul.f32 %v543, %v598
    %v612 = vmul.f32 %v544, %v608
    %v614 = vperm.slane %v516, 0
    %v616 = vmul.f32 %v609, %v614
    %v617 = vmul.f32 %v610, %v614
    %v618 = vmul.f32 %v611, %v614
    %v619 = vmul.f32 %v612, %v614
    %v621 = vperm.slane %v517, 0
    %v623 = vadd.f32 %v616, %v621
    %v624 = vadd.f32 %v617, %v621
    %v625 = vadd.f32 %v618, %v621
    %v626 = vadd.f32 %v619, %v621
    %v627 = vmax.f32 %v623, 0.0
    %v628 = vmax.f32 %v624, 0.0
    %v629 = vmax.f32 %v625, 0.0
    %v630 = vmax.f32 %v626, 0.0
    %v631 = vld [vmem:[%s10] sm:$0xff]
    %v632 = vld [vmem:[%s10 + $0x8] sm:$0xff]
    %v633 = vld [vmem:[%s10 + $0x10] sm:$0xff]
    %v634 = vld [vmem:[%s10 + $0x18] sm:$0xff]
    %v635 = vld [vmem:[%s10 + $0x20] sm:$0xff]
    %v636 = vld [vmem:[%s10 + $0x28] sm:$0xff]
    %v637 = vld [vmem:[%s10 + $0x30] sm:$0xff]
    %v638 = vld [vmem:[%s10 + $0x38] sm:$0xff]
    %v639 = vld [vmem:[%s11] sm:$0x1]
    %v641 = vperm.slane %v639, 0
    %v644 = vsel %vm305, %v627, 0
    %v647 = vsel %vm305, %v628, 0
    %v650 = vsel %vm305, %v629, 0
    %v653 = vsel %vm305, %v630, 0
    %655 = vmatpush.msra.mxu0 0.0
    %656 = vmatpush.msra.mxu0 0.0
    %657 = vmatpush.msra.mxu0 0.0
    %658 = vmatpush.msra.mxu0 0.0
    %659 = vmatpush.msra.mxu0 0.0
    %660 = vmatpush.msra.mxu0 0.0
    %661 = vmatpush.msra.mxu0 0.0
    %662 = vmatpush.msra.mxu0 0.0
    %663 = vmatpush.msra.mxu0 %v638
    %664 = vmatpush.msra.mxu0 %v637
    %665 = vmatpush.msra.mxu0 %v636
    %666 = vmatpush.msra.mxu0 %v635
    %667 = vmatpush.msra.mxu0 %v634
    %668 = vmatpush.msra.mxu0 %v633
    %669 = vmatpush.msra.mxu0 %v632
    %670 = vmatpush.msra.mxu0 %v631
    %671 = vmatmul.f32.gmra.mxu0 %v644
    %v672 = vpop.f32.mrf.mxu0
    %v673 = vadd.f32 %v641, %v672
    %674 = vmatmul.f32.gmra.mxu0 %v647
    %v675 = vpop.f32.mrf.mxu0
    %v676 = vadd.f32 %v641, %v675
    %677 = vmatmul.f32.gmra.mxu0 %v650
    %v678 = vpop.f32.mrf.mxu0
    %v679 = vadd.f32 %v641, %v678
    %680 = vmatmul.f32.gmra.mxu0 %v653
    %v681 = vpop.f32.mrf.mxu0
    %v682 = vadd.f32 %v641, %v681
    %683 = vdwg.mxu0
    %v684 = vadd.f32 %v673, %v315
    %v685 = vadd.f32 %v676, %v316
    %v686 = vadd.f32 %v679, %v317
    %v687 = vadd.f32 %v682, %v318
    %688 = vst.msk [vmem:[%s12] sm:$0xff] %vm61, %v684
    %689 = vst.msk [vmem:[%s12 + $0x8] sm:$0xff] %vm61, %v685
    %690 = vst.msk [vmem:[%s12 + $0x10] sm:$0xff] %vm61, %v686
    %691 = vst.msk [vmem:[%s12 + $0x18] sm:$0xff] %vm61, %v687
  $region57: #{deeper_gcn_forward.5} parent=0 // pred_fallthru
    _
  // Predicated region
  $region58: #{deeper_gcn_forward.5} parent=0 // pred_check
    _
  $region59: #{deeper_gcn_forward.5} parent=0 // pred_check_branch
    %693 = sbr.rel (0) target = $region61
  $region60: #{deeper_gcn_forward.5} parent=0 // pred_region
    _
  $region61: #{deeper_gcn_forward.5} parent=0 // pred_fallthru
    _
  // Predicated region
  $region62: #{deeper_gcn_forward.5} parent=0 // pred_check
    _
  $region63: #{deeper_gcn_forward.5} parent=0 // pred_check_branch
    %695 = sbr.rel (0) target = $region65
  $region64: #{deeper_gcn_forward.5} parent=0 // pred_region
    _
  $region65: #{deeper_gcn_forward.5} parent=0 // pred_fallthru
    _

</llo_original>
